<compile_context>
chip_gen: v6e
topology: v6e:2x2x1
jax: 0.10.0
libtpu: 0.0.40
codegen_flags: <defaults>
</compile_context>

<pallas_src>
import functools

import jax
import jax.numpy as jnp
from jax import lax
from jax.experimental import pallas as pl
from jax.experimental.pallas import tpu as pltpu


def _layer_norm(x, gamma, beta, eps=1e-5):
    """LayerNorm in f32; reuses the centered value so only one (x - mu) pass."""
    mu = jnp.mean(x, axis=-1, keepdims=True)
    xc = x - mu
    var = jnp.mean(xc * xc, axis=-1, keepdims=True)
    return xc * lax.rsqrt(var + eps) * gamma + beta


def encoder_layer_kernel(num_heads,
                         x_ref,
                         wqkv_ref, bqkv_ref,          # fused QKV projection
                         wo_ref, bo_ref,              # out-proj, split per head
                         g1_ref, be1_ref,
                         w1_ref, bf1_ref, w2_ref, bf2_ref,
                         g2_ref, be2_ref,
                         o_ref):
    x = x_ref[0]                                   # (S, D) f32
    S, D = x.shape
    dh = D // num_heads

    xb = x.astype(jnp.bfloat16)

    # --- fused QKV projection: one wide (S, D) x (D, 3D) MXU pass.
    # The two back-to-back linears (to_q/k/v and MHA in_proj) and the
    # 1/sqrt(dh) scale are already folded into wqkv/bqkv by the wrapper.
    qkv = jnp.dot(xb, wqkv_ref[...],
                  preferred_element_type=jnp.float32) + bqkv_ref[...]
    qkv = qkv.astype(jnp.bfloat16)                 # matmul operands for attention

    # --- multi-head scaled dot-product attention.
    # Output projection is accumulated per head: attn @ Wo == sum_h oh @ Wo[h],
    # so no lane-axis concatenate and no activation transpose is materialized.
    attn = None
    for h in range(num_heads):
        qh = qkv[:, h * dh:(h + 1) * dh]                    # (S, dh) bf16
        kh = qkv[:, D + h * dh:D + (h + 1) * dh]            # (S, dh) bf16
        vh = qkv[:, 2 * D + h * dh:2 * D + (h + 1) * dh]    # (S, dh) bf16

        # q @ k^T via dot_general contracting the last dims (no explicit .T).
        s = lax.dot_general(qh, kh, (((1,), (1,)), ((), ())),
                            preferred_element_type=jnp.float32)   # (S, S) f32
        s = s - jnp.max(s, axis=-1, keepdims=True)
        p = jnp.exp(s)
        denom = jnp.sum(p, axis=-1, keepdims=True)
        p = p * pl.reciprocal(denom, approx=True)                 # EUP divide

        oh = jnp.dot(p.astype(jnp.bfloat16), vh,
                     preferred_element_type=jnp.float32)          # (S, dh)
        contrib = jnp.dot(oh.astype(jnp.bfloat16), wo_ref[h],
                          preferred_element_type=jnp.float32)     # (S, D)
        attn = contrib if attn is None else attn + contrib
    attn = attn + bo_ref[...]

    # --- residual + norm1 (f32) ---
    x1 = _layer_norm(x + attn, g1_ref[...], be1_ref[...])

    # --- FeedForward: Linear -> ReLU -> Linear (bf16 operands, f32 accum) ---
    x1b = x1.astype(jnp.bfloat16)
    h1 = jnp.dot(x1b, w1_ref[...],
                 preferred_element_type=jnp.float32) + bf1_ref[...]
    h1 = jnp.maximum(h1, 0.0)
    ffo = jnp.dot(h1.astype(jnp.bfloat16), w2_ref[...],
                  preferred_element_type=jnp.float32) + bf2_ref[...]

    # --- residual + norm2 ---
    o_ref[0] = _layer_norm(x1 + ffo, g2_ref[...], be2_ref[...])


def fuse_params(p, num_heads):
    """Offline algebraic fusion + bf16 casting of matmul weights.

    Wq' = Wq @ Wiq (scaled), bq' = bq @ Wiq + biq (scaled); same (unscaled) for
    k and v; concatenated to one (D, 3D) QKV weight. Wo is split per head to
    (H, dh, D). Biases and LayerNorm params stay f32.
    """
    D = p["wq"].shape[0]
    dh = D // num_heads
    scale = 1.0 / jnp.sqrt(jnp.float32(dh))

    wq_f = (p["wq"] @ p["wiq"]) * scale
    bq_f = (p["bq"] @ p["wiq"] + p["biq"]) * scale
    wk_f = p["wk"] @ p["wik"]
    bk_f = p["bk"] @ p["wik"] + p["bik"]
    wv_f = p["wv"] @ p["wiv"]
    bv_f = p["bv"] @ p["wiv"] + p["biv"]

    return {
        "wqkv": jnp.concatenate([wq_f, wk_f, wv_f], axis=1).astype(jnp.bfloat16),
        "bqkv": jnp.concatenate([bq_f, bk_f, bv_f], axis=1),
        "wo_h": p["wo"].reshape(num_heads, dh, D).astype(jnp.bfloat16),
        "bo": p["bo"],
        "g1": p["g1"], "be1": p["be1"],
        "w1": p["w1"].astype(jnp.bfloat16), "bf1": p["bf1"],
        "w2": p["w2"].astype(jnp.bfloat16), "bf2": p["bf2"],
        "g2": p["g2"], "be2": p["be2"],
    }


def encoder_layer(x, fused, num_heads):
    B, S, D = x.shape
    order = ["wqkv", "bqkv", "wo_h", "bo", "g1", "be1",
             "w1", "bf1", "w2", "bf2", "g2", "be2"]
    weights = [fused[k] for k in order]

    in_specs = [pl.BlockSpec((1, S, D), lambda b: (b, 0, 0))]
    for w in weights:
        # Full-array (grid-invariant) blocks for weights.
        in_specs.append(pl.BlockSpec(w.shape, lambda b, nd=w.ndim: (0,) * nd))

    kernel = functools.partial(encoder_layer_kernel, num_heads)
    return pl.pallas_call(
        kernel,
        out_shape=jax.ShapeDtypeStruct((B, S, D), jnp.float32),
        grid=(B,),
        in_specs=in_specs,
        out_specs=pl.BlockSpec((1, S, D), lambda b: (b, 0, 0)),
        compiler_params=pltpu.CompilerParams(
            dimension_semantics=("parallel",)),
    )(x, *weights)


# ----------------------------- references -----------------------------------

def encoder_layer_ref_f32(x, p, num_heads):
    """Exact f32, un-fused reference of the PyTorch module forward."""
    B, S, D = x.shape
    dh = D // num_heads

    def split(t):
        return t.reshape(B, S, num_heads, dh).transpose(0, 2, 1, 3)

    q = x @ p["wq"] + p["bq"]
    k = x @ p["wk"] + p["bk"]
    v = x @ p["wv"] + p["bv"]
    qp = q @ p["wiq"] + p["biq"]
    kp = k @ p["wik"] + p["bik"]
    vp = v @ p["wiv"] + p["biv"]

    qh, kh, vh = split(qp), split(kp), split(vp)
    s = jnp.einsum("bhqd,bhkd->bhqk", qh, kh) / jnp.sqrt(jnp.float32(dh))
    pw = jax.nn.softmax(s, axis=-1)
    a = jnp.einsum("bhqk,bhkd->bhqd", pw, vh).transpose(0, 2, 1, 3).reshape(B, S, D)
    a = a @ p["wo"] + p["bo"]

    x1 = _layer_norm(x + a, p["g1"], p["be1"])
    h1 = jnp.maximum(x1 @ p["w1"] + p["bf1"], 0.0)
    ffo = h1 @ p["w2"] + p["bf2"]
    return _layer_norm(x1 + ffo, p["g2"], p["be2"])


def encoder_layer_ref_fused(x, f, num_heads):
    """Plain-JAX mirror of the kernel math (same fused bf16 operands)."""
    B, S, D = x.shape
    dh = D // num_heads
    xb = x.astype(jnp.bfloat16)

    qkv = jnp.einsum("bsd,df->bsf", xb, f["wqkv"],
                     preferred_element_type=jnp.float32) + f["bqkv"]
    qkv = qkv.astype(jnp.bfloat16)

    def split(t):
        return t.reshape(B, S, num_heads, dh).transpose(0, 2, 1, 3)

    q = split(qkv[..., :D])
    k = split(qkv[..., D:2 * D])
    v = split(qkv[..., 2 * D:])
    s = jnp.einsum("bhqd,bhkd->bhqk", q, k,
                   preferred_element_type=jnp.float32)   # scale already folded
    pw = jax.nn.softmax(s, axis=-1)
    o = jnp.einsum("bhqk,bhkd->bhqd", pw.astype(jnp.bfloat16), v,
                   preferred_element_type=jnp.float32)
    o = o.transpose(0, 2, 1, 3).reshape(B, S, D)
    attn = jnp.einsum("bsd,de->bse", o.astype(jnp.bfloat16),
                      f["wo_h"].reshape(D, D),
                      preferred_element_type=jnp.float32) + f["bo"]

    x1 = _layer_norm(x + attn, f["g1"], f["be1"])
    h1 = jnp.maximum(
        jnp.einsum("bsd,df->bsf", x1.astype(jnp.bfloat16), f["w1"],
                   preferred_element_type=jnp.float32) + f["bf1"], 0.0)
    ffo = jnp.einsum("bsf,fd->bsd", h1.astype(jnp.bfloat16), f["w2"],
                     preferred_element_type=jnp.float32) + f["bf2"]
    return _layer_norm(x1 + ffo, f["g2"], f["be2"])


def make_params(key, d_embed, d_ff):
    names_shapes = [
        ("wq", (d_embed, d_embed)), ("bq", (1, d_embed)),
        ("wk", (d_embed, d_embed)), ("bk", (1, d_embed)),
        ("wv", (d_embed, d_embed)), ("bv", (1, d_embed)),
        ("wiq", (d_embed, d_embed)), ("biq", (1, d_embed)),
        ("wik", (d_embed, d_embed)), ("bik", (1, d_embed)),
        ("wiv", (d_embed, d_embed)), ("biv", (1, d_embed)),
        ("wo", (d_embed, d_embed)), ("bo", (1, d_embed)),
        ("w1", (d_embed, d_ff)), ("bf1", (1, d_ff)),
        ("w2", (d_ff, d_embed)), ("bf2", (1, d_embed)),
    ]
    params = {}
    keys = jax.random.split(key, len(names_shapes))
    for (name, shape), kk in zip(names_shapes, keys):
        fan_in = shape[0] if name.startswith("w") else shape[1]
        bound = 1.0 / jnp.sqrt(jnp.float32(fan_in))
        params[name] = jax.random.uniform(
            kk, shape, jnp.float32, minval=-bound, maxval=bound)
    # LayerNorm params (torch default init: weight=1, bias=0)
    params["g1"] = jnp.ones((1, d_embed), jnp.float32)
    params["be1"] = jnp.zeros((1, d_embed), jnp.float32)
    params["g2"] = jnp.ones((1, d_embed), jnp.float32)
    params["be2"] = jnp.zeros((1, d_embed), jnp.float32)
    return params


if __name__ == "__main__":
    B, S, D, H, FF = 2, 8, 32, 4, 64

    key = jax.random.PRNGKey(0)
    kx, kp = jax.random.split(key)
    x = jax.random.normal(kx, (B, S, D), jnp.float32)
    raw_params = make_params(kp, D, FF)
    fused_params = fuse_params(raw_params, H)

    out = encoder_layer(x, fused_params, H)
    out = jax.block_until_ready(out)
    assert out.shape == (B, S, D)

    # Tight check against a plain-JAX mirror of the kernel math (same fused
    # bf16 operands); approx-reciprocal / reassociation are the only deltas.
    ref_q = encoder_layer_ref_fused(x, fused_params, H)
    err_q = float(jnp.max(jnp.abs(out - ref_q)))
    assert jnp.allclose(out, ref_q, atol=2e-2, rtol=2e-2), err_q

    # Loose sanity check against the exact f32 un-fused module semantics
    # (difference here is purely the bf16 weight/activation quantization).
    ref_f = encoder_layer_ref_f32(x, raw_params, H)
    err_f = float(jnp.max(jnp.abs(out - ref_f)))
    assert err_f < 0.25, err_f

    print("KERNEL_OK")
</pallas_src>

<mosaic_0001>
module attributes {stable_mosaic.version = 11 : i64} {
  func.func @encoder_layer_kernel(%arg0: i32, %arg1: memref<1x8x32xf32, #tpu.memory_space<vmem>>, %arg2: memref<32x96xbf16, #tpu.memory_space<vmem>>, %arg3: memref<1x96xf32, #tpu.memory_space<vmem>>, %arg4: memref<4x8x32xbf16, #tpu.memory_space<vmem>>, %arg5: memref<1x32xf32, #tpu.memory_space<vmem>>, %arg6: memref<1x32xf32, #tpu.memory_space<vmem>>, %arg7: memref<1x32xf32, #tpu.memory_space<vmem>>, %arg8: memref<32x64xbf16, #tpu.memory_space<vmem>>, %arg9: memref<1x64xf32, #tpu.memory_space<vmem>>, %arg10: memref<64x32xbf16, #tpu.memory_space<vmem>>, %arg11: memref<1x32xf32, #tpu.memory_space<vmem>>, %arg12: memref<1x32xf32, #tpu.memory_space<vmem>>, %arg13: memref<1x32xf32, #tpu.memory_space<vmem>>, %arg14: memref<1x8x32xf32, #tpu.memory_space<vmem>>) attributes {dimension_semantics = [#tpu.dimension_semantics<parallel>], iteration_bounds = array<i64: 2>, scalar_prefetch = 0 : i64, scratch_operands = 0 : i64, tpu.core_type = #tpu.core_type<tc>, window_params = [{transform_indices = @transform_0, window_bounds = array<i64: 1, 8, 32>}, {pipeline_mode = #tpu.pipeline_mode<synchronous>, transform_indices = @transform_1, window_bounds = array<i64: 32, 96>}, {pipeline_mode = #tpu.pipeline_mode<synchronous>, transform_indices = @transform_2, window_bounds = array<i64: 1, 96>}, {pipeline_mode = #tpu.pipeline_mode<synchronous>, transform_indices = @transform_3, window_bounds = array<i64: 4, 8, 32>}, {pipeline_mode = #tpu.pipeline_mode<synchronous>, transform_indices = @transform_4, window_bounds = array<i64: 1, 32>}, {pipeline_mode = #tpu.pipeline_mode<synchronous>, transform_indices = @transform_5, window_bounds = array<i64: 1, 32>}, {pipeline_mode = #tpu.pipeline_mode<synchronous>, transform_indices = @transform_6, window_bounds = array<i64: 1, 32>}, {pipeline_mode = #tpu.pipeline_mode<synchronous>, transform_indices = @transform_7, window_bounds = array<i64: 32, 64>}, {pipeline_mode = #tpu.pipeline_mode<synchronous>, transform_indices = @transform_8, window_bounds = array<i64: 1, 64>}, {pipeline_mode = #tpu.pipeline_mode<synchronous>, transform_indices = @transform_9, window_bounds = array<i64: 64, 32>}, {pipeline_mode = #tpu.pipeline_mode<synchronous>, transform_indices = @transform_10, window_bounds = array<i64: 1, 32>}, {pipeline_mode = #tpu.pipeline_mode<synchronous>, transform_indices = @transform_11, window_bounds = array<i64: 1, 32>}, {pipeline_mode = #tpu.pipeline_mode<synchronous>, transform_indices = @transform_12, window_bounds = array<i64: 1, 32>}, {transform_indices = @transform_13, window_bounds = array<i64: 1, 8, 32>}]} {
    %c0 = arith.constant 0 : index
    %c0_0 = arith.constant 0 : index
    %c0_1 = arith.constant 0 : index
    %0 = vector.load %arg1[%c0, %c0_0, %c0_1] : memref<1x8x32xf32, #tpu.memory_space<vmem>>, vector<1x8x32xf32>
    %1 = vector.shape_cast %0 : vector<1x8x32xf32> to vector<8x32xf32>
    %2 = arith.truncf %1 : vector<8x32xf32> to vector<8x32xbf16>
    %c0_2 = arith.constant 0 : index
    %c0_3 = arith.constant 0 : index
    %3 = vector.load %arg2[%c0_2, %c0_3] : memref<32x96xbf16, #tpu.memory_space<vmem>>, vector<32x96xbf16>
    %cst = arith.constant dense<0.000000e+00> : vector<8x96xf32>
    %4 = tpu.matmul %2, %3, %cst {dimension_numbers = #tpu.dot_dimension_numbers<[1], [0], [0], [1], [0, 0, 1, 1], [], []>} : vector<8x32xbf16>, vector<32x96xbf16>, vector<8x96xf32> -> vector<8x96xf32>
    %c0_4 = arith.constant 0 : index
    %c0_5 = arith.constant 0 : index
    %5 = vector.load %arg3[%c0_4, %c0_5] : memref<1x96xf32, #tpu.memory_space<vmem>>, vector<1x96xf32>
    %6 = vector.broadcast %5 : vector<1x96xf32> to vector<8x96xf32>
    %7 = arith.addf %4, %6 : vector<8x96xf32>
    %8 = arith.truncf %7 : vector<8x96xf32> to vector<8x96xbf16>
    %9 = vector.extract_strided_slice %8 {offsets = [0, 0], sizes = [8, 8], strides = [1, 1]} : vector<8x96xbf16> to vector<8x8xbf16>
    %10 = vector.extract_strided_slice %8 {offsets = [0, 32], sizes = [8, 8], strides = [1, 1]} : vector<8x96xbf16> to vector<8x8xbf16>
    %11 = vector.extract_strided_slice %8 {offsets = [0, 64], sizes = [8, 8], strides = [1, 1]} : vector<8x96xbf16> to vector<8x8xbf16>
    %cst_6 = arith.constant dense<0.000000e+00> : vector<8x8xf32>
    %12 = tpu.matmul %9, %10, %cst_6 {dimension_numbers = #tpu.dot_dimension_numbers<[1], [1], [0], [0], [0, 0, 1, 0], [], []>} : vector<8x8xbf16>, vector<8x8xbf16>, vector<8x8xf32> -> vector<8x8xf32>
    %cst_7 = arith.constant dense<0xFF800000> : vector<8xf32>
    %13 = vector.multi_reduction <maximumf>, %12, %cst_7 [1] : vector<8x8xf32> to vector<8xf32>
    %14 = vector.shape_cast %13 : vector<8xf32> to vector<8x1xf32>
    %15 = vector.broadcast %14 : vector<8x1xf32> to vector<8x8xf32>
    %16 = arith.subf %12, %15 : vector<8x8xf32>
    %17 = math.exp %16 : vector<8x8xf32>
    %cst_8 = arith.constant dense<0.000000e+00> : vector<8xf32>
    %18 = vector.multi_reduction <add>, %17, %cst_8 [1] : vector<8x8xf32> to vector<8xf32>
    %19 = vector.shape_cast %18 : vector<8xf32> to vector<8x1xf32>
    %20 = tpu.reciprocal %19 {approx = true} : vector<8x1xf32> -> vector<8x1xf32>
    %21 = vector.broadcast %20 : vector<8x1xf32> to vector<8x8xf32>
    %22 = arith.mulf %17, %21 : vector<8x8xf32>
    %23 = arith.truncf %22 : vector<8x8xf32> to vector<8x8xbf16>
    %cst_9 = arith.constant dense<0.000000e+00> : vector<8x8xf32>
    %24 = tpu.matmul %23, %11, %cst_9 {dimension_numbers = #tpu.dot_dimension_numbers<[1], [0], [0], [1], [0, 0, 1, 1], [], []>} : vector<8x8xbf16>, vector<8x8xbf16>, vector<8x8xf32> -> vector<8x8xf32>
    %25 = arith.truncf %24 : vector<8x8xf32> to vector<8x8xbf16>
    %c0_10 = arith.constant 0 : index
    %c0_11 = arith.constant 0 : index
    %c0_12 = arith.constant 0 : index
    %26 = vector.load %arg4[%c0_10, %c0_11, %c0_12] : memref<4x8x32xbf16, #tpu.memory_space<vmem>>, vector<1x8x32xbf16>
    %27 = vector.shape_cast %26 : vector<1x8x32xbf16> to vector<8x32xbf16>
    %cst_13 = arith.constant dense<0.000000e+00> : vector<8x32xf32>
    %28 = tpu.matmul %25, %27, %cst_13 {dimension_numbers = #tpu.dot_dimension_numbers<[1], [0], [0], [1], [0, 0, 1, 1], [], []>} : vector<8x8xbf16>, vector<8x32xbf16>, vector<8x32xf32> -> vector<8x32xf32>
    %29 = vector.extract_strided_slice %8 {offsets = [0, 8], sizes = [8, 8], strides = [1, 1]} : vector<8x96xbf16> to vector<8x8xbf16>
    %30 = vector.extract_strided_slice %8 {offsets = [0, 40], sizes = [8, 8], strides = [1, 1]} : vector<8x96xbf16> to vector<8x8xbf16>
    %31 = vector.extract_strided_slice %8 {offsets = [0, 72], sizes = [8, 8], strides = [1, 1]} : vector<8x96xbf16> to vector<8x8xbf16>
    %cst_14 = arith.constant dense<0.000000e+00> : vector<8x8xf32>
    %32 = tpu.matmul %29, %30, %cst_14 {dimension_numbers = #tpu.dot_dimension_numbers<[1], [1], [0], [0], [0, 0, 1, 0], [], []>} : vector<8x8xbf16>, vector<8x8xbf16>, vector<8x8xf32> -> vector<8x8xf32>
    %cst_15 = arith.constant dense<0xFF800000> : vector<8xf32>
    %33 = vector.multi_reduction <maximumf>, %32, %cst_15 [1] : vector<8x8xf32> to vector<8xf32>
    %34 = vector.shape_cast %33 : vector<8xf32> to vector<8x1xf32>
    %35 = vector.broadcast %34 : vector<8x1xf32> to vector<8x8xf32>
    %36 = arith.subf %32, %35 : vector<8x8xf32>
    %37 = math.exp %36 : vector<8x8xf32>
    %cst_16 = arith.constant dense<0.000000e+00> : vector<8xf32>
    %38 = vector.multi_reduction <add>, %37, %cst_16 [1] : vector<8x8xf32> to vector<8xf32>
    %39 = vector.shape_cast %38 : vector<8xf32> to vector<8x1xf32>
    %40 = tpu.reciprocal %39 {approx = true} : vector<8x1xf32> -> vector<8x1xf32>
    %41 = vector.broadcast %40 : vector<8x1xf32> to vector<8x8xf32>
    %42 = arith.mulf %37, %41 : vector<8x8xf32>
    %43 = arith.truncf %42 : vector<8x8xf32> to vector<8x8xbf16>
    %cst_17 = arith.constant dense<0.000000e+00> : vector<8x8xf32>
    %44 = tpu.matmul %43, %31, %cst_17 {dimension_numbers = #tpu.dot_dimension_numbers<[1], [0], [0], [1], [0, 0, 1, 1], [], []>} : vector<8x8xbf16>, vector<8x8xbf16>, vector<8x8xf32> -> vector<8x8xf32>
    %45 = arith.truncf %44 : vector<8x8xf32> to vector<8x8xbf16>
    %c1 = arith.constant 1 : index
    %c0_18 = arith.constant 0 : index
    %c0_19 = arith.constant 0 : index
    %46 = vector.load %arg4[%c1, %c0_18, %c0_19] : memref<4x8x32xbf16, #tpu.memory_space<vmem>>, vector<1x8x32xbf16>
    %47 = vector.shape_cast %46 : vector<1x8x32xbf16> to vector<8x32xbf16>
    %cst_20 = arith.constant dense<0.000000e+00> : vector<8x32xf32>
    %48 = tpu.matmul %45, %47, %cst_20 {dimension_numbers = #tpu.dot_dimension_numbers<[1], [0], [0], [1], [0, 0, 1, 1], [], []>} : vector<8x8xbf16>, vector<8x32xbf16>, vector<8x32xf32> -> vector<8x32xf32>
    %49 = arith.addf %28, %48 : vector<8x32xf32>
    %50 = vector.extract_strided_slice %8 {offsets = [0, 16], sizes = [8, 8], strides = [1, 1]} : vector<8x96xbf16> to vector<8x8xbf16>
    %51 = vector.extract_strided_slice %8 {offsets = [0, 48], sizes = [8, 8], strides = [1, 1]} : vector<8x96xbf16> to vector<8x8xbf16>
    %52 = vector.extract_strided_slice %8 {offsets = [0, 80], sizes = [8, 8], strides = [1, 1]} : vector<8x96xbf16> to vector<8x8xbf16>
    %cst_21 = arith.constant dense<0.000000e+00> : vector<8x8xf32>
    %53 = tpu.matmul %50, %51, %cst_21 {dimension_numbers = #tpu.dot_dimension_numbers<[1], [1], [0], [0], [0, 0, 1, 0], [], []>} : vector<8x8xbf16>, vector<8x8xbf16>, vector<8x8xf32> -> vector<8x8xf32>
    %cst_22 = arith.constant dense<0xFF800000> : vector<8xf32>
    %54 = vector.multi_reduction <maximumf>, %53, %cst_22 [1] : vector<8x8xf32> to vector<8xf32>
    %55 = vector.shape_cast %54 : vector<8xf32> to vector<8x1xf32>
    %56 = vector.broadcast %55 : vector<8x1xf32> to vector<8x8xf32>
    %57 = arith.subf %53, %56 : vector<8x8xf32>
    %58 = math.exp %57 : vector<8x8xf32>
    %cst_23 = arith.constant dense<0.000000e+00> : vector<8xf32>
    %59 = vector.multi_reduction <add>, %58, %cst_23 [1] : vector<8x8xf32> to vector<8xf32>
    %60 = vector.shape_cast %59 : vector<8xf32> to vector<8x1xf32>
    %61 = tpu.reciprocal %60 {approx = true} : vector<8x1xf32> -> vector<8x1xf32>
    %62 = vector.broadcast %61 : vector<8x1xf32> to vector<8x8xf32>
    %63 = arith.mulf %58, %62 : vector<8x8xf32>
    %64 = arith.truncf %63 : vector<8x8xf32> to vector<8x8xbf16>
    %cst_24 = arith.constant dense<0.000000e+00> : vector<8x8xf32>
    %65 = tpu.matmul %64, %52, %cst_24 {dimension_numbers = #tpu.dot_dimension_numbers<[1], [0], [0], [1], [0, 0, 1, 1], [], []>} : vector<8x8xbf16>, vector<8x8xbf16>, vector<8x8xf32> -> vector<8x8xf32>
    %66 = arith.truncf %65 : vector<8x8xf32> to vector<8x8xbf16>
    %c2 = arith.constant 2 : index
    %c0_25 = arith.constant 0 : index
    %c0_26 = arith.constant 0 : index
    %67 = vector.load %arg4[%c2, %c0_25, %c0_26] : memref<4x8x32xbf16, #tpu.memory_space<vmem>>, vector<1x8x32xbf16>
    %68 = vector.shape_cast %67 : vector<1x8x32xbf16> to vector<8x32xbf16>
    %cst_27 = arith.constant dense<0.000000e+00> : vector<8x32xf32>
    %69 = tpu.matmul %66, %68, %cst_27 {dimension_numbers = #tpu.dot_dimension_numbers<[1], [0], [0], [1], [0, 0, 1, 1], [], []>} : vector<8x8xbf16>, vector<8x32xbf16>, vector<8x32xf32> -> vector<8x32xf32>
    %70 = arith.addf %49, %69 : vector<8x32xf32>
    %71 = vector.extract_strided_slice %8 {offsets = [0, 24], sizes = [8, 8], strides = [1, 1]} : vector<8x96xbf16> to vector<8x8xbf16>
    %72 = vector.extract_strided_slice %8 {offsets = [0, 56], sizes = [8, 8], strides = [1, 1]} : vector<8x96xbf16> to vector<8x8xbf16>
    %73 = vector.extract_strided_slice %8 {offsets = [0, 88], sizes = [8, 8], strides = [1, 1]} : vector<8x96xbf16> to vector<8x8xbf16>
    %cst_28 = arith.constant dense<0.000000e+00> : vector<8x8xf32>
    %74 = tpu.matmul %71, %72, %cst_28 {dimension_numbers = #tpu.dot_dimension_numbers<[1], [1], [0], [0], [0, 0, 1, 0], [], []>} : vector<8x8xbf16>, vector<8x8xbf16>, vector<8x8xf32> -> vector<8x8xf32>
    %cst_29 = arith.constant dense<0xFF800000> : vector<8xf32>
    %75 = vector.multi_reduction <maximumf>, %74, %cst_29 [1] : vector<8x8xf32> to vector<8xf32>
    %76 = vector.shape_cast %75 : vector<8xf32> to vector<8x1xf32>
    %77 = vector.broadcast %76 : vector<8x1xf32> to vector<8x8xf32>
    %78 = arith.subf %74, %77 : vector<8x8xf32>
    %79 = math.exp %78 : vector<8x8xf32>
    %cst_30 = arith.constant dense<0.000000e+00> : vector<8xf32>
    %80 = vector.multi_reduction <add>, %79, %cst_30 [1] : vector<8x8xf32> to vector<8xf32>
    %81 = vector.shape_cast %80 : vector<8xf32> to vector<8x1xf32>
    %82 = tpu.reciprocal %81 {approx = true} : vector<8x1xf32> -> vector<8x1xf32>
    %83 = vector.broadcast %82 : vector<8x1xf32> to vector<8x8xf32>
    %84 = arith.mulf %79, %83 : vector<8x8xf32>
    %85 = arith.truncf %84 : vector<8x8xf32> to vector<8x8xbf16>
    %cst_31 = arith.constant dense<0.000000e+00> : vector<8x8xf32>
    %86 = tpu.matmul %85, %73, %cst_31 {dimension_numbers = #tpu.dot_dimension_numbers<[1], [0], [0], [1], [0, 0, 1, 1], [], []>} : vector<8x8xbf16>, vector<8x8xbf16>, vector<8x8xf32> -> vector<8x8xf32>
    %87 = arith.truncf %86 : vector<8x8xf32> to vector<8x8xbf16>
    %c3 = arith.constant 3 : index
    %c0_32 = arith.constant 0 : index
    %c0_33 = arith.constant 0 : index
    %88 = vector.load %arg4[%c3, %c0_32, %c0_33] : memref<4x8x32xbf16, #tpu.memory_space<vmem>>, vector<1x8x32xbf16>
    %89 = vector.shape_cast %88 : vector<1x8x32xbf16> to vector<8x32xbf16>
    %cst_34 = arith.constant dense<0.000000e+00> : vector<8x32xf32>
    %90 = tpu.matmul %87, %89, %cst_34 {dimension_numbers = #tpu.dot_dimension_numbers<[1], [0], [0], [1], [0, 0, 1, 1], [], []>} : vector<8x8xbf16>, vector<8x32xbf16>, vector<8x32xf32> -> vector<8x32xf32>
    %91 = arith.addf %70, %90 : vector<8x32xf32>
    %c0_35 = arith.constant 0 : index
    %c0_36 = arith.constant 0 : index
    %92 = vector.load %arg5[%c0_35, %c0_36] : memref<1x32xf32, #tpu.memory_space<vmem>>, vector<1x32xf32>
    %93 = vector.broadcast %92 : vector<1x32xf32> to vector<8x32xf32>
    %94 = arith.addf %91, %93 : vector<8x32xf32>
    %95 = arith.addf %1, %94 : vector<8x32xf32>
    %c0_37 = arith.constant 0 : index
    %c0_38 = arith.constant 0 : index
    %96 = vector.load %arg6[%c0_37, %c0_38] : memref<1x32xf32, #tpu.memory_space<vmem>>, vector<1x32xf32>
    %c0_39 = arith.constant 0 : index
    %c0_40 = arith.constant 0 : index
    %97 = vector.load %arg7[%c0_39, %c0_40] : memref<1x32xf32, #tpu.memory_space<vmem>>, vector<1x32xf32>
    %cst_41 = arith.constant dense<0.000000e+00> : vector<8xf32>
    %98 = vector.multi_reduction <add>, %95, %cst_41 [1] : vector<8x32xf32> to vector<8xf32>
    %99 = vector.shape_cast %98 : vector<8xf32> to vector<8x1xf32>
    %cst_42 = arith.constant 3.200000e+01 : f32
    %100 = vector.broadcast %cst_42 : f32 to vector<8x1xf32>
    %101 = arith.divf %99, %100 : vector<8x1xf32>
    %102 = vector.broadcast %101 : vector<8x1xf32> to vector<8x32xf32>
    %103 = arith.subf %95, %102 : vector<8x32xf32>
    %104 = arith.mulf %103, %103 : vector<8x32xf32>
    %cst_43 = arith.constant dense<0.000000e+00> : vector<8xf32>
    %105 = vector.multi_reduction <add>, %104, %cst_43 [1] : vector<8x32xf32> to vector<8xf32>
    %106 = vector.shape_cast %105 : vector<8xf32> to vector<8x1xf32>
    %cst_44 = arith.constant 3.200000e+01 : f32
    %107 = vector.broadcast %cst_44 : f32 to vector<8x1xf32>
    %108 = arith.divf %106, %107 : vector<8x1xf32>
    %cst_45 = arith.constant 9.99999974E-6 : f32
    %109 = vector.broadcast %cst_45 : f32 to vector<8x1xf32>
    %110 = arith.addf %108, %109 : vector<8x1xf32>
    %111 = math.rsqrt %110 : vector<8x1xf32>
    %112 = vector.broadcast %111 : vector<8x1xf32> to vector<8x32xf32>
    %113 = arith.mulf %103, %112 : vector<8x32xf32>
    %114 = vector.broadcast %96 : vector<1x32xf32> to vector<8x32xf32>
    %115 = arith.mulf %113, %114 : vector<8x32xf32>
    %116 = vector.broadcast %97 : vector<1x32xf32> to vector<8x32xf32>
    %117 = arith.addf %115, %116 : vector<8x32xf32>
    %118 = arith.truncf %117 : vector<8x32xf32> to vector<8x32xbf16>
    %c0_46 = arith.constant 0 : index
    %c0_47 = arith.constant 0 : index
    %119 = vector.load %arg8[%c0_46, %c0_47] : memref<32x64xbf16, #tpu.memory_space<vmem>>, vector<32x64xbf16>
    %cst_48 = arith.constant dense<0.000000e+00> : vector<8x64xf32>
    %120 = tpu.matmul %118, %119, %cst_48 {dimension_numbers = #tpu.dot_dimension_numbers<[1], [0], [0], [1], [0, 0, 1, 1], [], []>} : vector<8x32xbf16>, vector<32x64xbf16>, vector<8x64xf32> -> vector<8x64xf32>
    %c0_49 = arith.constant 0 : index
    %c0_50 = arith.constant 0 : index
    %121 = vector.load %arg9[%c0_49, %c0_50] : memref<1x64xf32, #tpu.memory_space<vmem>>, vector<1x64xf32>
    %122 = vector.broadcast %121 : vector<1x64xf32> to vector<8x64xf32>
    %123 = arith.addf %120, %122 : vector<8x64xf32>
    %cst_51 = arith.constant 0.000000e+00 : f32
    %124 = vector.broadcast %cst_51 : f32 to vector<8x64xf32>
    %125 = arith.maximumf %123, %124 : vector<8x64xf32>
    %126 = arith.truncf %125 : vector<8x64xf32> to vector<8x64xbf16>
    %c0_52 = arith.constant 0 : index
    %c0_53 = arith.constant 0 : index
    %127 = vector.load %arg10[%c0_52, %c0_53] : memref<64x32xbf16, #tpu.memory_space<vmem>>, vector<64x32xbf16>
    %cst_54 = arith.constant dense<0.000000e+00> : vector<8x32xf32>
    %128 = tpu.matmul %126, %127, %cst_54 {dimension_numbers = #tpu.dot_dimension_numbers<[1], [0], [0], [1], [0, 0, 1, 1], [], []>} : vector<8x64xbf16>, vector<64x32xbf16>, vector<8x32xf32> -> vector<8x32xf32>
    %c0_55 = arith.constant 0 : index
    %c0_56 = arith.constant 0 : index
    %129 = vector.load %arg11[%c0_55, %c0_56] : memref<1x32xf32, #tpu.memory_space<vmem>>, vector<1x32xf32>
    %130 = vector.broadcast %129 : vector<1x32xf32> to vector<8x32xf32>
    %131 = arith.addf %128, %130 : vector<8x32xf32>
    %132 = arith.addf %117, %131 : vector<8x32xf32>
    %c0_57 = arith.constant 0 : index
    %c0_58 = arith.constant 0 : index
    %133 = vector.load %arg12[%c0_57, %c0_58] : memref<1x32xf32, #tpu.memory_space<vmem>>, vector<1x32xf32>
    %c0_59 = arith.constant 0 : index
    %c0_60 = arith.constant 0 : index
    %134 = vector.load %arg13[%c0_59, %c0_60] : memref<1x32xf32, #tpu.memory_space<vmem>>, vector<1x32xf32>
    %cst_61 = arith.constant dense<0.000000e+00> : vector<8xf32>
    %135 = vector.multi_reduction <add>, %132, %cst_61 [1] : vector<8x32xf32> to vector<8xf32>
    %136 = vector.shape_cast %135 : vector<8xf32> to vector<8x1xf32>
    %cst_62 = arith.constant 3.200000e+01 : f32
    %137 = vector.broadcast %cst_62 : f32 to vector<8x1xf32>
    %138 = arith.divf %136, %137 : vector<8x1xf32>
    %139 = vector.broadcast %138 : vector<8x1xf32> to vector<8x32xf32>
    %140 = arith.subf %132, %139 : vector<8x32xf32>
    %141 = arith.mulf %140, %140 : vector<8x32xf32>
    %cst_63 = arith.constant dense<0.000000e+00> : vector<8xf32>
    %142 = vector.multi_reduction <add>, %141, %cst_63 [1] : vector<8x32xf32> to vector<8xf32>
    %143 = vector.shape_cast %142 : vector<8xf32> to vector<8x1xf32>
    %cst_64 = arith.constant 3.200000e+01 : f32
    %144 = vector.broadcast %cst_64 : f32 to vector<8x1xf32>
    %145 = arith.divf %143, %144 : vector<8x1xf32>
    %cst_65 = arith.constant 9.99999974E-6 : f32
    %146 = vector.broadcast %cst_65 : f32 to vector<8x1xf32>
    %147 = arith.addf %145, %146 : vector<8x1xf32>
    %148 = math.rsqrt %147 : vector<8x1xf32>
    %149 = vector.broadcast %148 : vector<8x1xf32> to vector<8x32xf32>
    %150 = arith.mulf %140, %149 : vector<8x32xf32>
    %151 = vector.broadcast %133 : vector<1x32xf32> to vector<8x32xf32>
    %152 = arith.mulf %150, %151 : vector<8x32xf32>
    %153 = vector.broadcast %134 : vector<1x32xf32> to vector<8x32xf32>
    %154 = arith.addf %152, %153 : vector<8x32xf32>
    %c0_66 = arith.constant 0 : index
    %c0_67 = arith.constant 0 : index
    %c0_68 = arith.constant 0 : index
    %155 = vector.load %arg14[%c0_66, %c0_67, %c0_68] : memref<1x8x32xf32, #tpu.memory_space<vmem>>, vector<1x8x32xf32>
    %156 = vector.shape_cast %155 : vector<1x8x32xf32> to vector<8x32xf32>
    %157 = vector.shape_cast %154 : vector<8x32xf32> to vector<1x8x32xf32>
    tpu.vector_store %arg14[%c0_66, %c0_67, %c0_68], %157 {strides = array<i32>} : memref<1x8x32xf32, #tpu.memory_space<vmem>>, vector<1x8x32xf32>,
    return
  }
  func.func @transform_0(%arg0: i32) -> (i32, i32, i32) {
    %c0_i32 = arith.constant 0 : i32
    %c0_i32_0 = arith.constant 0 : i32
    %c0_i32_1 = arith.constant 0 : i32
    return %arg0, %c0_i32, %c0_i32_0 : i32, i32, i32
  }
  func.func @transform_1(%arg0: i32) -> (i32, i32) {
    %c0_i32 = arith.constant 0 : i32
    %c0_i32_0 = arith.constant 0 : i32
    %c0_i32_1 = arith.constant 0 : i32
    return %c0_i32, %c0_i32_0 : i32, i32
  }
  func.func @transform_2(%arg0: i32) -> (i32, i32) {
    %c0_i32 = arith.constant 0 : i32
    %c0_i32_0 = arith.constant 0 : i32
    %c0_i32_1 = arith.constant 0 : i32
    return %c0_i32, %c0_i32_0 : i32, i32
  }
  func.func @transform_3(%arg0: i32) -> (i32, i32, i32) {
    %c0_i32 = arith.constant 0 : i32
    %c0_i32_0 = arith.constant 0 : i32
    %c0_i32_1 = arith.constant 0 : i32
    %c0_i32_2 = arith.constant 0 : i32
    return %c0_i32, %c0_i32_0, %c0_i32_1 : i32, i32, i32
  }
  func.func @transform_4(%arg0: i32) -> (i32, i32) {
    %c0_i32 = arith.constant 0 : i32
    %c0_i32_0 = arith.constant 0 : i32
    %c0_i32_1 = arith.constant 0 : i32
    return %c0_i32, %c0_i32_0 : i32, i32
  }
  func.func @transform_5(%arg0: i32) -> (i32, i32) {
    %c0_i32 = arith.constant 0 : i32
    %c0_i32_0 = arith.constant 0 : i32
    %c0_i32_1 = arith.constant 0 : i32
    return %c0_i32, %c0_i32_0 : i32, i32
  }
  func.func @transform_6(%arg0: i32) -> (i32, i32) {
    %c0_i32 = arith.constant 0 : i32
    %c0_i32_0 = arith.constant 0 : i32
    %c0_i32_1 = arith.constant 0 : i32
    return %c0_i32, %c0_i32_0 : i32, i32
  }
  func.func @transform_7(%arg0: i32) -> (i32, i32) {
    %c0_i32 = arith.constant 0 : i32
    %c0_i32_0 = arith.constant 0 : i32
    %c0_i32_1 = arith.constant 0 : i32
    return %c0_i32, %c0_i32_0 : i32, i32
  }
  func.func @transform_8(%arg0: i32) -> (i32, i32) {
    %c0_i32 = arith.constant 0 : i32
    %c0_i32_0 = arith.constant 0 : i32
    %c0_i32_1 = arith.constant 0 : i32
    return %c0_i32, %c0_i32_0 : i32, i32
  }
  func.func @transform_9(%arg0: i32) -> (i32, i32) {
    %c0_i32 = arith.constant 0 : i32
    %c0_i32_0 = arith.constant 0 : i32
    %c0_i32_1 = arith.constant 0 : i32
    return %c0_i32, %c0_i32_0 : i32, i32
  }
  func.func @transform_10(%arg0: i32) -> (i32, i32) {
    %c0_i32 = arith.constant 0 : i32
    %c0_i32_0 = arith.constant 0 : i32
    %c0_i32_1 = arith.constant 0 : i32
    return %c0_i32, %c0_i32_0 : i32, i32
  }
  func.func @transform_11(%arg0: i32) -> (i32, i32) {
    %c0_i32 = arith.constant 0 : i32
    %c0_i32_0 = arith.constant 0 : i32
    %c0_i32_1 = arith.constant 0 : i32
    return %c0_i32, %c0_i32_0 : i32, i32
  }
  func.func @transform_12(%arg0: i32) -> (i32, i32) {
    %c0_i32 = arith.constant 0 : i32
    %c0_i32_0 = arith.constant 0 : i32
    %c0_i32_1 = arith.constant 0 : i32
    return %c0_i32, %c0_i32_0 : i32, i32
  }
  func.func @transform_13(%arg0: i32) -> (i32, i32, i32) {
    %c0_i32 = arith.constant 0 : i32
    %c0_i32_0 = arith.constant 0 : i32
    %c0_i32_1 = arith.constant 0 : i32
    return %arg0, %c0_i32, %c0_i32_0 : i32, i32, i32
  }
}

</mosaic_0001>

<llo_original>
// kernel: tpu_custom_call.1
$region0: #{tpu_custom_call.1}
  #allocation0 [shape = 'u32[]', space=smem, size = 0x4, offset = 0x4, fixed_abs, tag = 'smem constant byte address 0x4 - core index']
  #allocation1 [shape = 'u32[144,128]{1,0:T(1,128)}', space=vmem, size = 0x12000, scoped, tag = 'internal scratch']
  %s0 = inlined_call_operand.vmem [shape: f32[2,8,32], index: 0, kind: input, shape index: {}]
  %s1 = inlined_call_operand.vmem [shape: bf16[32,96], index: 1, kind: input, shape index: {}]
  %s2 = inlined_call_operand.hbm [shape: f32[1,96], index: 2, kind: input, shape index: {}]
  %s3 = inlined_call_operand.vmem [shape: bf16[4,8,32], index: 3, kind: input, shape index: {}]
  %s4 = inlined_call_operand.hbm [shape: f32[1,32], index: 4, kind: input, shape index: {}]
  %s5 = inlined_call_operand.hbm [shape: f32[1,32], index: 5, kind: input, shape index: {}]
  %s6 = inlined_call_operand.hbm [shape: f32[1,32], index: 6, kind: input, shape index: {}]
  %s7 = inlined_call_operand.hbm [shape: bf16[32,64], index: 7, kind: input, shape index: {}]
  %s8 = inlined_call_operand.hbm [shape: f32[1,64], index: 8, kind: input, shape index: {}]
  %s9 = inlined_call_operand.vmem [shape: bf16[64,32], index: 9, kind: input, shape index: {}]
  %s10 = inlined_call_operand.vmem [shape: f32[1,32], index: 10, kind: input, shape index: {}]
  %s11 = inlined_call_operand.vmem [shape: f32[1,32], index: 11, kind: input, shape index: {}]
  %s12 = inlined_call_operand.vmem [shape: f32[1,32], index: 12, kind: input, shape index: {}]
  %s13 = inlined_call_operand.hbm [shape: f32[2,8,32], index: 13, kind: output, shape index: {}]
  %s14 = sld [smem:[#allocation0]]
  $region109: #{tpu_custom_call.1} parent=0
    _
  %s16 = ssub.s32 1, %s14
  %s17 = scalar_select 0, %s16, %s14
  $region1: #{tpu_custom_call.1} parent=0
    #allocation2 [shape = 'u8[512]{0}', space=vmem, size = 0x400, scoped, tag = 'input window, operand 2, single buffered']
    #allocation3 [shape = 's32[2]{0}', space=sflag, size = 0x8, scoped, tag = 'scoped memory for tpu_custom_call.1']
    #allocation4 [shape = 's32[2]{0}', space=sflag, size = 0x8, scoped, tag = 'scoped memory for tpu_custom_call.1']
    #allocation5 [shape = 'u8[512]{0}', space=vmem, size = 0x400, scoped, tag = 'input window, operand 4, single buffered']
    #allocation6 [shape = 's32[1]{0}', space=sflag, size = 0x4, scoped, tag = 'scoped memory for tpu_custom_call.1']
    #allocation7 [shape = 'u8[512]{0}', space=vmem, size = 0x400, scoped, tag = 'input window, operand 5, single buffered']
    #allocation8 [shape = 'u8[512]{0}', space=vmem, size = 0x400, scoped, tag = 'input window, operand 6, single buffered']
    #allocation9 [shape = 's32[1]{0}', space=sflag, size = 0x4, scoped, tag = 'scoped memory for tpu_custom_call.1']
    #allocation10 [shape = 'u8[8192]{0}', space=vmem, size = 0x2000, scoped, tag = 'input window, operand 7, single buffered']
    #allocation11 [shape = 'u8[512]{0}', space=vmem, size = 0x400, scoped, tag = 'input window, operand 8, single buffered']
    #allocation12 [shape = 's32[1]{0}', space=sflag, size = 0x4, scoped, tag = 'scoped memory for tpu_custom_call.1']
    #allocation13 [shape = 'u8[8192]{0}', space=vmem, size = 0x2000, scoped, tag = 'output window, operand 0']
    %18 = vsyncpa [#allocation3], 0
    %19 = vsyncpa [#allocation6], 0
    %20 = vsyncpa [#allocation9], 0
    %21 = vsyncpa [#allocation12], 0
    %22 = vsyncpa [#allocation4], 0
    %s23 = scalar_lea.sflag [#allocation4], 1
    %24 = vsyncpa %s23, 0
    loop: start=0, step=1, limit=4
    $region2: #{tpu_custom_call.1} parent=1 // loop_pre_header
      _
    $region3: #{tpu_custom_call.1} parent=1 // loop_header
      %s26 = sphi 0, %s30
      %p27 = scmp.ge.s32.totalorder %s26, 4
      %s36 = sphi 0, %s38
      %s39 = sphi 0, %s36
      %s40 = sphi 0, %s39
      %s56 = sphi 0, %s40
      %s60 = sphi 0, %s60
      %s62 = sphi 0, %s60
      %s63 = sphi 0, %s62
      %s77 = sphi 0, %s63
      %s81 = sphi 0, %s81
      %s83 = sphi 0, %s81
      %s84 = sphi 0, %s83
      %s98 = sphi 0, %s84
      %s102 = sphi 0, %s102
      %s104 = sphi 0, %s102
      %s105 = sphi 0, %s104
      %s119 = sphi 0, %s105
      %s123 = sphi 0, %s123
      %s125 = sphi 0, %s123
      %s126 = sphi 0, %s125
      %s140 = sphi 0, %s126
      %s144 = sphi 0, %s144
      %s146 = sphi 0, %s144
      %s147 = sphi 0, %s146
      %s161 = sphi 0, %s147
      %s165 = sphi 0, %s165
      %s167 = sphi 0, %s165
      %s168 = sphi 0, %s167
      %s182 = sphi 0, %s168
      %s186 = sphi 0, %s186
      %s188 = sphi 0, %s186
      %s189 = sphi 0, %s188
      %s203 = sphi 0, %s189
      %s207 = sphi 0, %s207
      %s209 = sphi 0, %s207
      %s210 = sphi 0, %s209
      %s224 = sphi 0, %s210
      %s228 = sphi 0, %s228
      %s230 = sphi 0, %s228
      %s231 = sphi 0, %s230
      %s245 = sphi 0, %s231
      %s249 = sphi 0, %s249
      %s251 = sphi 0, %s249
      %s252 = sphi 0, %s251
      %s266 = sphi 0, %s252
      %s270 = sphi 0, %s270
      %s272 = sphi 0, %s270
      %s273 = sphi 0, %s272
      %s287 = sphi 0, %s273
      %s291 = sphi 0, %s291
      %s293 = sphi 0, %s291
      %s294 = sphi 0, %s293
      %s308 = sphi 0, %s294
      %s314 = sphi 0, %s316
      %s317 = sphi 0, %s314
      %s318 = sphi 0, %s317
      %s334 = sphi 0, %s318
    $region4: #{tpu_custom_call.1} parent=1 // loop_header_branch
      %29 = sbr.rel (%p27) target = $region8
    $region5: #{tpu_custom_call.1} parent=1 // loop_body
      %s31 = ssub.s32 %s26, 1
      %s32 = ssub.s32 %s26, 2
      %s33 = sadd.s32 %s26, 1
      %s34 = ssub.s32 %s26, %s33
      %p35 = scmp.eq.s32.totalorder %s34, 0
      %s37 = sadd.s32 %s36, 1
      %s38 = scalar_select %p35, %s36, %s37
      %p41 = pneg %p35
      %p42 = scmp.eq.s32.totalorder %s26, 1
      %p43 = por %p41, %p42
      %p44 = scmp.ne.s32.totalorder %s36, %s39
      %p45 = scmp.eq.s32.totalorder %s26, 0
      %p46 = por %p44, %p45
      %p47 = scmp.ne.s32.totalorder %s36, %s39
      %p48 = scmp.eq.s32.totalorder %s31, 1
      %p49 = por %p47, %p48
      %p50 = scmp.ne.s32.totalorder %s39, %s40
      %p51 = scmp.eq.s32.totalorder %s31, 0
      %p52 = por %p50, %p51
      %p53 = scmp.ne.s32.totalorder %s39, %s40
      %p54 = scmp.eq.s32.totalorder %s32, 1
      %p55 = por %p53, %p54
      %p57 = scmp.ne.s32.totalorder %s40, %s56
      %p58 = scmp.eq.s32.totalorder %s32, 0
      %p59 = por %p57, %p58
      %s61 = sadd.s32 %s60, 1
      %p64 = scmp.eq.s32.totalorder %s26, 1
      %p65 = scmp.ne.s32.totalorder %s60, %s62
      %p66 = scmp.eq.s32.totalorder %s26, 0
      %p67 = por %p65, %p66
      %p68 = scmp.ne.s32.totalorder %s60, %s62
      %p69 = scmp.eq.s32.totalorder %s31, 1
      %p70 = por %p68, %p69
      %p71 = scmp.ne.s32.totalorder %s62, %s63
      %p72 = scmp.eq.s32.totalorder %s31, 0
      %p73 = por %p71, %p72
      %p74 = scmp.ne.s32.totalorder %s62, %s63
      %p75 = scmp.eq.s32.totalorder %s32, 1
      %p76 = por %p74, %p75
      %p78 = scmp.ne.s32.totalorder %s63, %s77
      %p79 = scmp.eq.s32.totalorder %s32, 0
      %p80 = por %p78, %p79
      %s82 = sadd.s32 %s81, 1
      %p85 = scmp.eq.s32.totalorder %s26, 1
      %p86 = scmp.ne.s32.totalorder %s81, %s83
      %p87 = scmp.eq.s32.totalorder %s26, 0
      %p88 = por %p86, %p87
      %p89 = scmp.ne.s32.totalorder %s81, %s83
      %p90 = scmp.eq.s32.totalorder %s31, 1
      %p91 = por %p89, %p90
      %p92 = scmp.ne.s32.totalorder %s83, %s84
      %p93 = scmp.eq.s32.totalorder %s31, 0
      %p94 = por %p92, %p93
      %p95 = scmp.ne.s32.totalorder %s83, %s84
      %p96 = scmp.eq.s32.totalorder %s32, 1
      %p97 = por %p95, %p96
      %p99 = scmp.ne.s32.totalorder %s84, %s98
      %p100 = scmp.eq.s32.totalorder %s32, 0
      %p101 = por %p99, %p100
      %s103 = sadd.s32 %s102, 1
      %p106 = scmp.eq.s32.totalorder %s26, 1
      %p107 = scmp.ne.s32.totalorder %s102, %s104
      %p108 = scmp.eq.s32.totalorder %s26, 0
      %p109 = por %p107, %p108
      %p110 = scmp.ne.s32.totalorder %s102, %s104
      %p111 = scmp.eq.s32.totalorder %s31, 1
      %p112 = por %p110, %p111
      %p113 = scmp.ne.s32.totalorder %s104, %s105
      %p114 = scmp.eq.s32.totalorder %s31, 0
      %p115 = por %p113, %p114
      %p116 = scmp.ne.s32.totalorder %s104, %s105
      %p117 = scmp.eq.s32.totalorder %s32, 1
      %p118 = por %p116, %p117
      %p120 = scmp.ne.s32.totalorder %s105, %s119
      %p121 = scmp.eq.s32.totalorder %s32, 0
      %p122 = por %p120, %p121
      %s124 = sadd.s32 %s123, 1
      %p127 = scmp.eq.s32.totalorder %s26, 1
      %p128 = scmp.ne.s32.totalorder %s123, %s125
      %p129 = scmp.eq.s32.totalorder %s26, 0
      %p130 = por %p128, %p129
      %p131 = scmp.ne.s32.totalorder %s123, %s125
      %p132 = scmp.eq.s32.totalorder %s31, 1
      %p133 = por %p131, %p132
      %p134 = scmp.ne.s32.totalorder %s125, %s126
      %p135 = scmp.eq.s32.totalorder %s31, 0
      %p136 = por %p134, %p135
      %p137 = scmp.ne.s32.totalorder %s125, %s126
      %p138 = scmp.eq.s32.totalorder %s32, 1
      %p139 = por %p137, %p138
      %p141 = scmp.ne.s32.totalorder %s126, %s140
      %p142 = scmp.eq.s32.totalorder %s32, 0
      %p143 = por %p141, %p142
      %s145 = sadd.s32 %s144, 1
      %p148 = scmp.eq.s32.totalorder %s26, 1
      %p149 = scmp.ne.s32.totalorder %s144, %s146
      %p150 = scmp.eq.s32.totalorder %s26, 0
      %p151 = por %p149, %p150
      %p152 = scmp.ne.s32.totalorder %s144, %s146
      %p153 = scmp.eq.s32.totalorder %s31, 1
      %p154 = por %p152, %p153
      %p155 = scmp.ne.s32.totalorder %s146, %s147
      %p156 = scmp.eq.s32.totalorder %s31, 0
      %p157 = por %p155, %p156
      %p158 = scmp.ne.s32.totalorder %s146, %s147
      %p159 = scmp.eq.s32.totalorder %s32, 1
      %p160 = por %p158, %p159
      %p162 = scmp.ne.s32.totalorder %s147, %s161
      %p163 = scmp.eq.s32.totalorder %s32, 0
      %p164 = por %p162, %p163
      %s166 = sadd.s32 %s165, 1
      %p169 = scmp.eq.s32.totalorder %s26, 1
      %p170 = scmp.ne.s32.totalorder %s165, %s167
      %p171 = scmp.eq.s32.totalorder %s26, 0
      %p172 = por %p170, %p171
      %p173 = scmp.ne.s32.totalorder %s165, %s167
      %p174 = scmp.eq.s32.totalorder %s31, 1
      %p175 = por %p173, %p174
      %p176 = scmp.ne.s32.totalorder %s167, %s168
      %p177 = scmp.eq.s32.totalorder %s31, 0
      %p178 = por %p176, %p177
      %p179 = scmp.ne.s32.totalorder %s167, %s168
      %p180 = scmp.eq.s32.totalorder %s32, 1
      %p181 = por %p179, %p180
      %p183 = scmp.ne.s32.totalorder %s168, %s182
      %p184 = scmp.eq.s32.totalorder %s32, 0
      %p185 = por %p183, %p184
      %s187 = sadd.s32 %s186, 1
      %p190 = scmp.eq.s32.totalorder %s26, 1
      %p191 = scmp.ne.s32.totalorder %s186, %s188
      %p192 = scmp.eq.s32.totalorder %s26, 0
      %p193 = por %p191, %p192
      %p194 = scmp.ne.s32.totalorder %s186, %s188
      %p195 = scmp.eq.s32.totalorder %s31, 1
      %p196 = por %p194, %p195
      %p197 = scmp.ne.s32.totalorder %s188, %s189
      %p198 = scmp.eq.s32.totalorder %s31, 0
      %p199 = por %p197, %p198
      %p200 = scmp.ne.s32.totalorder %s188, %s189
      %p201 = scmp.eq.s32.totalorder %s32, 1
      %p202 = por %p200, %p201
      %p204 = scmp.ne.s32.totalorder %s189, %s203
      %p205 = scmp.eq.s32.totalorder %s32, 0
      %p206 = por %p204, %p205
      %s208 = sadd.s32 %s207, 1
      %p211 = scmp.eq.s32.totalorder %s26, 1
      %p212 = scmp.ne.s32.totalorder %s207, %s209
      %p213 = scmp.eq.s32.totalorder %s26, 0
      %p214 = por %p212, %p213
      %p215 = scmp.ne.s32.totalorder %s207, %s209
      %p216 = scmp.eq.s32.totalorder %s31, 1
      %p217 = por %p215, %p216
      %p218 = scmp.ne.s32.totalorder %s209, %s210
      %p219 = scmp.eq.s32.totalorder %s31, 0
      %p220 = por %p218, %p219
      %p221 = scmp.ne.s32.totalorder %s209, %s210
      %p222 = scmp.eq.s32.totalorder %s32, 1
      %p223 = por %p221, %p222
      %p225 = scmp.ne.s32.totalorder %s210, %s224
      %p226 = scmp.eq.s32.totalorder %s32, 0
      %p227 = por %p225, %p226
      %s229 = sadd.s32 %s228, 1
      %p232 = scmp.eq.s32.totalorder %s26, 1
      %p233 = scmp.ne.s32.totalorder %s228, %s230
      %p234 = scmp.eq.s32.totalorder %s26, 0
      %p235 = por %p233, %p234
      %p236 = scmp.ne.s32.totalorder %s228, %s230
      %p237 = scmp.eq.s32.totalorder %s31, 1
      %p238 = por %p236, %p237
      %p239 = scmp.ne.s32.totalorder %s230, %s231
      %p240 = scmp.eq.s32.totalorder %s31, 0
      %p241 = por %p239, %p240
      %p242 = scmp.ne.s32.totalorder %s230, %s231
      %p243 = scmp.eq.s32.totalorder %s32, 1
      %p244 = por %p242, %p243
      %p246 = scmp.ne.s32.totalorder %s231, %s245
      %p247 = scmp.eq.s32.totalorder %s32, 0
      %p248 = por %p246, %p247
      %s250 = sadd.s32 %s249, 1
      %p253 = scmp.eq.s32.totalorder %s26, 1
      %p254 = scmp.ne.s32.totalorder %s249, %s251
      %p255 = scmp.eq.s32.totalorder %s26, 0
      %p256 = por %p254, %p255
      %p257 = scmp.ne.s32.totalorder %s249, %s251
      %p258 = scmp.eq.s32.totalorder %s31, 1
      %p259 = por %p257, %p258
      %p260 = scmp.ne.s32.totalorder %s251, %s252
      %p261 = scmp.eq.s32.totalorder %s31, 0
      %p262 = por %p260, %p261
      %p263 = scmp.ne.s32.totalorder %s251, %s252
      %p264 = scmp.eq.s32.totalorder %s32, 1
      %p265 = por %p263, %p264
      %p267 = scmp.ne.s32.totalorder %s252, %s266
      %p268 = scmp.eq.s32.totalorder %s32, 0
      %p269 = por %p267, %p268
      %s271 = sadd.s32 %s270, 1
      %p274 = scmp.eq.s32.totalorder %s26, 1
      %p275 = scmp.ne.s32.totalorder %s270, %s272
      %p276 = scmp.eq.s32.totalorder %s26, 0
      %p277 = por %p275, %p276
      %p278 = scmp.ne.s32.totalorder %s270, %s272
      %p279 = scmp.eq.s32.totalorder %s31, 1
      %p280 = por %p278, %p279
      %p281 = scmp.ne.s32.totalorder %s272, %s273
      %p282 = scmp.eq.s32.totalorder %s31, 0
      %p283 = por %p281, %p282
      %p284 = scmp.ne.s32.totalorder %s272, %s273
      %p285 = scmp.eq.s32.totalorder %s32, 1
      %p286 = por %p284, %p285
      %p288 = scmp.ne.s32.totalorder %s273, %s287
      %p289 = scmp.eq.s32.totalorder %s32, 0
      %p290 = por %p288, %p289
      %s292 = sadd.s32 %s291, 1
      %p295 = scmp.eq.s32.totalorder %s26, 1
      %p296 = scmp.ne.s32.totalorder %s291, %s293
      %p297 = scmp.eq.s32.totalorder %s26, 0
      %p298 = por %p296, %p297
      %p299 = scmp.ne.s32.totalorder %s291, %s293
      %p300 = scmp.eq.s32.totalorder %s31, 1
      %p301 = por %p299, %p300
      %p302 = scmp.ne.s32.totalorder %s293, %s294
      %p303 = scmp.eq.s32.totalorder %s31, 0
      %p304 = por %p302, %p303
      %p305 = scmp.ne.s32.totalorder %s293, %s294
      %p306 = scmp.eq.s32.totalorder %s32, 1
      %p307 = por %p305, %p306
      %p309 = scmp.ne.s32.totalorder %s294, %s308
      %p310 = scmp.eq.s32.totalorder %s32, 0
      %p311 = por %p309, %p310
      %s312 = ssub.s32 %s26, %s33
      %p313 = scmp.eq.s32.totalorder %s312, 0
      %s315 = sadd.s32 %s314, 1
      %s316 = scalar_select %p313, %s314, %s315
      %p319 = pneg %p313
      %p320 = scmp.eq.s32.totalorder %s26, 1
      %p321 = por %p319, %p320
      %p322 = scmp.ne.s32.totalorder %s314, %s317
      %p323 = scmp.eq.s32.totalorder %s26, 0
      %p324 = por %p322, %p323
      %p325 = scmp.ne.s32.totalorder %s314, %s317
      %p326 = scmp.eq.s32.totalorder %s31, 1
      %p327 = por %p325, %p326
      %p328 = scmp.ne.s32.totalorder %s317, %s318
      %p329 = scmp.eq.s32.totalorder %s31, 0
      %p330 = por %p328, %p329
      %p331 = scmp.ne.s32.totalorder %s317, %s318
      %p332 = scmp.eq.s32.totalorder %s32, 1
      %p333 = por %p331, %p332
      %p335 = scmp.ne.s32.totalorder %s318, %s334
      %p336 = scmp.eq.s32.totalorder %s32, 0
      %p337 = por %p335, %p336
      %p338 = scmp.le.s32.totalorder 1, %s26
      %p339 = scmp.lt.s32.totalorder %s26, 3
      %p340 = pnand %p338, %p339
      %p341 = pneg %p340
      // Predicated region
      $region9: #{tpu_custom_call.1} parent=5 // pred_check
        _
      $region10: #{tpu_custom_call.1} parent=5 // pred_check_branch
        %343 = sbr.rel (%p340) target = $region12
      $region11: #{tpu_custom_call.1} parent=5 // pred_region
        %s344 = ssub.s32 %s26, 1
        // Predicated region
        $region13: #{tpu_custom_call.1} parent=11 // pred_check
          %p345 = pneg %p73
        $region14: #{tpu_custom_call.1} parent=11 // pred_check_branch
          %347 = sbr.rel (%p345) target = $region16
        $region15: #{tpu_custom_call.1} parent=11 // pred_region
          _
        $region16: #{tpu_custom_call.1} parent=11 // pred_fallthru
          _
        // Predicated region
        $region17: #{tpu_custom_call.1} parent=11 // pred_check
          %p348 = pneg %p94
        $region18: #{tpu_custom_call.1} parent=11 // pred_check_branch
          %350 = sbr.rel (%p348) target = $region20
        $region19: #{tpu_custom_call.1} parent=11 // pred_region
          %s352 = ssub.s32 16, 16
          %353 = vsyncadd [#allocation3], %s352
          %s355 = sshll.u32 [#allocation2], 4
          %s356 = int_to_ptr.vmem [resolvable:$true] %s355
          %358 = dma.hbm_to_vmem [thread:$0]  %s2, 16, %s356, [#allocation3]
        $region20: #{tpu_custom_call.1} parent=11 // pred_fallthru
          _
        // Predicated region
        $region21: #{tpu_custom_call.1} parent=11 // pred_check
          %p359 = pneg %p115
        $region22: #{tpu_custom_call.1} parent=11 // pred_check_branch
          %361 = sbr.rel (%p359) target = $region24
        $region23: #{tpu_custom_call.1} parent=11 // pred_region
          _
        $region24: #{tpu_custom_call.1} parent=11 // pred_fallthru
          _
        // Predicated region
        $region25: #{tpu_custom_call.1} parent=11 // pred_check
          %p362 = pneg %p136
        $region26: #{tpu_custom_call.1} parent=11 // pred_check_branch
          %364 = sbr.rel (%p362) target = $region28
        $region27: #{tpu_custom_call.1} parent=11 // pred_region
          %s366 = ssub.s32 16, 16
          %367 = vsyncadd [#allocation6], %s366
          %s369 = sshll.u32 [#allocation5], 4
          %s370 = int_to_ptr.vmem [resolvable:$true] %s369
          %372 = dma.hbm_to_vmem [thread:$0]  %s4, 16, %s370, [#allocation6]
        $region28: #{tpu_custom_call.1} parent=11 // pred_fallthru
          _
        // Predicated region
        $region29: #{tpu_custom_call.1} parent=11 // pred_check
          %p373 = pneg %p157
        $region30: #{tpu_custom_call.1} parent=11 // pred_check_branch
          %375 = sbr.rel (%p373) target = $region32
        $region31: #{tpu_custom_call.1} parent=11 // pred_region
          %s377 = ssub.s32 16, 16
          %378 = vsyncadd [#allocation6], %s377
          %s380 = sshll.u32 [#allocation7], 4
          %s381 = int_to_ptr.vmem [resolvable:$true] %s380
          %383 = dma.hbm_to_vmem [thread:$0]  %s5, 16, %s381, [#allocation6]
        $region32: #{tpu_custom_call.1} parent=11 // pred_fallthru
          _
        // Predicated region
        $region33: #{tpu_custom_call.1} parent=11 // pred_check
          %p384 = pneg %p178
        $region34: #{tpu_custom_call.1} parent=11 // pred_check_branch
          %386 = sbr.rel (%p384) target = $region36
        $region35: #{tpu_custom_call.1} parent=11 // pred_region
          %s388 = ssub.s32 16, 16
          %389 = vsyncadd [#allocation9], %s388
          %s391 = sshll.u32 [#allocation8], 4
          %s392 = int_to_ptr.vmem [resolvable:$true] %s391
          %394 = dma.hbm_to_vmem [thread:$0]  %s6, 16, %s392, [#allocation9]
        $region36: #{tpu_custom_call.1} parent=11 // pred_fallthru
          _
        // Predicated region
        $region37: #{tpu_custom_call.1} parent=11 // pred_check
          %p395 = pneg %p199
        $region38: #{tpu_custom_call.1} parent=11 // pred_check_branch
          %397 = sbr.rel (%p395) target = $region40
        $region39: #{tpu_custom_call.1} parent=11 // pred_region
          %s399 = ssub.s32 256, 256
          %400 = vsyncadd [#allocation9], %s399
          %s401 = sshll.u32 [#allocation10], 4
          %s402 = int_to_ptr.vmem [resolvable:$true] %s401
          %407 = dma.hbm_to_vmem [thread:$0]  %s7, 256, %s402, [#allocation9], 64, 64, 4
        $region40: #{tpu_custom_call.1} parent=11 // pred_fallthru
          _
        // Predicated region
        $region41: #{tpu_custom_call.1} parent=11 // pred_check
          %p408 = pneg %p220
        $region42: #{tpu_custom_call.1} parent=11 // pred_check_branch
          %410 = sbr.rel (%p408) target = $region44
        $region43: #{tpu_custom_call.1} parent=11 // pred_region
          %s412 = ssub.s32 16, 16
          %413 = vsyncadd [#allocation12], %s412
          %s415 = sshll.u32 [#allocation11], 4
          %s416 = int_to_ptr.vmem [resolvable:$true] %s415
          %418 = dma.hbm_to_vmem [thread:$0]  %s8, 16, %s416, [#allocation12]
        $region44: #{tpu_custom_call.1} parent=11 // pred_fallthru
          _
        // Predicated region
        $region45: #{tpu_custom_call.1} parent=11 // pred_check
          %p419 = pneg %p241
        $region46: #{tpu_custom_call.1} parent=11 // pred_check_branch
          %421 = sbr.rel (%p419) target = $region48
        $region47: #{tpu_custom_call.1} parent=11 // pred_region
          _
        $region48: #{tpu_custom_call.1} parent=11 // pred_fallthru
          _
        // Predicated region
        $region49: #{tpu_custom_call.1} parent=11 // pred_check
          %p422 = pneg %p262
        $region50: #{tpu_custom_call.1} parent=11 // pred_check_branch
          %424 = sbr.rel (%p422) target = $region52
        $region51: #{tpu_custom_call.1} parent=11 // pred_region
          _
        $region52: #{tpu_custom_call.1} parent=11 // pred_fallthru
          _
        // Predicated region
        $region53: #{tpu_custom_call.1} parent=11 // pred_check
          %p425 = pneg %p283
        $region54: #{tpu_custom_call.1} parent=11 // pred_check_branch
          %427 = sbr.rel (%p425) target = $region56
        $region55: #{tpu_custom_call.1} parent=11 // pred_region
          _
        $region56: #{tpu_custom_call.1} parent=11 // pred_fallthru
          _
        // Predicated region
        $region57: #{tpu_custom_call.1} parent=11 // pred_check
          %p428 = pneg %p304
        $region58: #{tpu_custom_call.1} parent=11 // pred_check_branch
          %430 = sbr.rel (%p428) target = $region60
        $region59: #{tpu_custom_call.1} parent=11 // pred_region
          _
        $region60: #{tpu_custom_call.1} parent=11 // pred_fallthru
          _
      $region12: #{tpu_custom_call.1} parent=5 // pred_fallthru
        _
      %p431 = scmp.lt.s32.totalorder %s26, 2
      // Predicated region
      $region61: #{tpu_custom_call.1} parent=5 // pred_check
        %p432 = pneg %p431
      $region62: #{tpu_custom_call.1} parent=5 // pred_check_branch
        %434 = sbr.rel (%p432) target = $region64
      $region63: #{tpu_custom_call.1} parent=5 // pred_region
        // Predicated region
        $region65: #{tpu_custom_call.1} parent=63 // pred_check
          %p435 = pneg %p46
        $region66: #{tpu_custom_call.1} parent=63 // pred_check_branch
          %437 = sbr.rel (%p435) target = $region68
        $region67: #{tpu_custom_call.1} parent=63 // pred_region
          %p438 = scmp.lt.s32.totalorder %s26, 1
          %s439 = scalar_select %p438, %s26, 1
          %s440 = smul.addr %s439, 8
          %s441 = scalar_lea.vmem %s0, %s440
        $region68: #{tpu_custom_call.1} parent=63 // pred_fallthru
          _
      $region64: #{tpu_custom_call.1} parent=5 // pred_fallthru
        _
      %p442 = scmp.le.s32.totalorder 1, %s26
      %p443 = scmp.lt.s32.totalorder %s26, 3
      %p444 = pnand %p442, %p443
      %p445 = pneg %p444
      // Predicated region
      $region69: #{tpu_custom_call.1} parent=5 // pred_check
        _
      $region70: #{tpu_custom_call.1} parent=5 // pred_check_branch
        %447 = sbr.rel (%p444) target = $region72
      $region71: #{tpu_custom_call.1} parent=5 // pred_region
        %s448 = ssub.s32 %s26, 1
        // Predicated region
        $region73: #{tpu_custom_call.1} parent=71 // pred_check
          %p449 = pneg %p94
        $region74: #{tpu_custom_call.1} parent=71 // pred_check_branch
          %451 = sbr.rel (%p449) target = $region76
        $region75: #{tpu_custom_call.1} parent=71 // pred_region
          %452 = dma.done [#allocation3], 16
        $region76: #{tpu_custom_call.1} parent=71 // pred_fallthru
          _
        // Predicated region
        $region77: #{tpu_custom_call.1} parent=71 // pred_check
          %p453 = pneg %p136
        $region78: #{tpu_custom_call.1} parent=71 // pred_check_branch
          %455 = sbr.rel (%p453) target = $region80
        $region79: #{tpu_custom_call.1} parent=71 // pred_region
          %456 = dma.done [#allocation6], 16
        $region80: #{tpu_custom_call.1} parent=71 // pred_fallthru
          _
        // Predicated region
        $region81: #{tpu_custom_call.1} parent=71 // pred_check
          %p457 = pneg %p157
        $region82: #{tpu_custom_call.1} parent=71 // pred_check_branch
          %459 = sbr.rel (%p457) target = $region84
        $region83: #{tpu_custom_call.1} parent=71 // pred_region
          %460 = dma.done [#allocation6], 16
        $region84: #{tpu_custom_call.1} parent=71 // pred_fallthru
          _
        // Predicated region
        $region85: #{tpu_custom_call.1} parent=71 // pred_check
          %p461 = pneg %p178
        $region86: #{tpu_custom_call.1} parent=71 // pred_check_branch
          %463 = sbr.rel (%p461) target = $region88
        $region87: #{tpu_custom_call.1} parent=71 // pred_region
          %464 = dma.done [#allocation9], 16
        $region88: #{tpu_custom_call.1} parent=71 // pred_fallthru
          _
        // Predicated region
        $region89: #{tpu_custom_call.1} parent=71 // pred_check
          %p465 = pneg %p199
        $region90: #{tpu_custom_call.1} parent=71 // pred_check_branch
          %467 = sbr.rel (%p465) target = $region92
        $region91: #{tpu_custom_call.1} parent=71 // pred_region
          %468 = dma.done [#allocation9], 256
        $region92: #{tpu_custom_call.1} parent=71 // pred_fallthru
          _
        // Predicated region
        $region93: #{tpu_custom_call.1} parent=71 // pred_check
          %p469 = pneg %p220
        $region94: #{tpu_custom_call.1} parent=71 // pred_check_branch
          %471 = sbr.rel (%p469) target = $region96
        $region95: #{tpu_custom_call.1} parent=71 // pred_region
          %472 = dma.done [#allocation12], 16
        $region96: #{tpu_custom_call.1} parent=71 // pred_fallthru
          _
        %p473 = scmp.lt.s32.totalorder %s31, 1
        %s474 = scalar_select %p473, %s31, 1
        %s475 = smul.addr %s474, 8
        %s476 = scalar_lea.vmem %s0, %s475
        %p477 = pneg %p52
        %p478 = pneg %p49
        %p479 = pneg %p73
        %p480 = pneg %p70
        %p481 = pneg %p94
        %p482 = pneg %p91
        %p483 = pneg %p115
        %p484 = pneg %p112
        %p485 = pneg %p136
        %p486 = pneg %p133
        %p487 = pneg %p157
        %p488 = pneg %p154
        %p489 = pneg %p178
        %p490 = pneg %p175
        %p491 = pneg %p199
        %p492 = pneg %p196
        %p493 = pneg %p220
        %p494 = pneg %p217
        %p495 = pneg %p241
        %p496 = pneg %p238
        %p497 = pneg %p262
        %p498 = pneg %p259
        %p499 = pneg %p283
        %p500 = pneg %p280
        %p501 = pneg %p304
        %p502 = pneg %p301
        %p503 = pneg %p330
        %p504 = pneg %p327
        %s505 = sand.u32 %s317, 1
        %s506 = scalar_lea.sflag [#allocation4], %s505
        %s507 = sand.u32 %s317, 1
        %s508 = smul.addr %s507, 8
        %s509 = scalar_lea.vmem [#allocation13], %s508
        %p510 = scmp.lt.s32.totalorder %s31, 1
        %s511 = scalar_select %p510, %s31, 1
        %s512 = smul.addr %s511, 8
        %s513 = scalar_lea.vmem %s0, %s512
        %v515 = vld [vmem:[%s513] sm:$0xff]
        %v516 = vpack.c.bf16 %v515, %v515
        %v517 = vld [vmem:[%s1] sm:$0xf]
        %v518 = vld [vmem:[%s1 + $0x4] sm:$0xf]
        %v519 = vld [vmem:[%s1 + $0x8] sm:$0xf]
        %v520 = vld [vmem:[%s1 + $0xc] sm:$0xf]
        %v521 = vld [vmem:[#allocation2] sm:$0x1]
        %v523 = vlaneseq
        %v524 = vshrl.u32 %v523, 7
        %v525 = vsub.s32 0, %v524
        %v526 = vrot.slane %v521, %v525
        %v532 = vunpack.c.l.b16 %v517
        %v533 = vunpack.c.l.b16 %v518
        %v534 = vunpack.c.l.b16 %v519
        %v535 = vunpack.c.l.b16 %v520
        %v536 = vpack.c.b16 %v533, %v532
        %v537 = vpack.c.b16 %v535, %v534
        %vm540 = vcmask 261120
        %v542 = vsel %vm540, %v516, 0
        %544 = vmatprep.subr.bf16.mxu0 0
        %545 = vmatpush1.bf16.msra.mxu0 0
        %546 = vmatprep.subr.bf16.mxu0 0
        %547 = vmatpush1.bf16.msra.mxu0 0
        %548 = vmatprep.subr.bf16.mxu0 0
        %549 = vmatpush1.bf16.msra.mxu0 0
        %550 = vmatprep.subr.bf16.mxu0 0
        %551 = vmatpush1.bf16.msra.mxu0 0
        %552 = vmatprep.subr.bf16.mxu0 0
        %553 = vmatpush1.bf16.msra.mxu0 0
        %554 = vmatprep.subr.bf16.mxu0 0
        %555 = vmatpush1.bf16.msra.mxu0 0
        %556 = vmatprep.subr.bf16.mxu0 0
        %557 = vmatpush1.bf16.msra.mxu0 %v537
        %558 = vmatprep.subr.bf16.mxu0 0
        %559 = vmatpush1.bf16.msra.mxu0 %v536
        %560 = vmatprep.subr.bf16.mxu0 0
        %561 = vmatpush2.bf16.msra.mxu0 0
        %562 = vmatprep.subr.bf16.mxu0 0
        %563 = vmatpush2.bf16.msra.mxu0 0
        %564 = vmatprep.subr.bf16.mxu0 0
        %565 = vmatpush2.bf16.msra.mxu0 0
        %566 = vmatprep.subr.bf16.mxu0 0
        %567 = vmatpush2.bf16.msra.mxu0 0
        %568 = vmatprep.subr.bf16.mxu0 0
        %569 = vmatpush2.bf16.msra.mxu0 0
        %570 = vmatprep.subr.bf16.mxu0 0
        %571 = vmatpush2.bf16.msra.mxu0 0
        %572 = vmatprep.subr.bf16.mxu0 0
        %573 = vmatpush2.bf16.msra.mxu0 0
        %574 = vmatprep.subr.bf16.mxu0 0
        %575 = vmatpush2.bf16.msra.mxu0 0
        %576 = vmatprep.mubr.bf16.mxu0 0
        %577 = vmatmul.mubr.bf16.gmra.mxu0 %v542
        %v578 = vpop.f32.mrf.mxu0
        %v579 = vadd.f32 %v526, %v578
        %v580 = vpop.f32.mrf.mxu0
        %v581 = vpop.f32.mrf.mxu0
        %v582 = vpop.f32.mrf.mxu0
        %583 = vdwg.mxu0
        %v584 = vpack.c.bf16 %v579, %v579
        %586 = vrot.lane.b32.xlu0 %v584, 96
        %v587 = vpop.permute.xlu0 %586
        %vm588 = vcmask 64512
        %v590 = vsel %vm588, %v584, 0
        %v593 = vsel %vm588, %v587, 0
        %595 = vmatprep.subr.bf16.mxu0 0
        %596 = vmatpush1.bf16.xpose.msra.mxu0 0
        %597 = vmatprep.subr.bf16.mxu0 0
        %598 = vmatpush1.bf16.xpose.msra.mxu0 0
        %599 = vmatprep.subr.bf16.mxu0 0
        %600 = vmatpush1.bf16.xpose.msra.mxu0 0
        %601 = vmatprep.subr.bf16.mxu0 0
        %602 = vmatpush1.bf16.xpose.msra.mxu0 0
        %603 = vmatprep.subr.bf16.mxu0 0
        %604 = vmatpush1.bf16.xpose.msra.mxu0 0
        %605 = vmatprep.subr.bf16.mxu0 0
        %606 = vmatpush1.bf16.xpose.msra.mxu0 0
        %607 = vmatprep.subr.bf16.mxu0 0
        %608 = vmatpush1.bf16.xpose.msra.mxu0 0
        %609 = vmatprep.subr.bf16.mxu0 0
        %610 = vmatpush1.bf16.xpose.msra.mxu0 %v593
        %611 = vmatprep.subr.bf16.mxu0 0
        %612 = vmatpush2.bf16.xpose.msra.mxu0 0
        %613 = vmatprep.subr.bf16.mxu0 0
        %614 = vmatpush2.bf16.xpose.msra.mxu0 0
        %615 = vmatprep.subr.bf16.mxu0 0
        %616 = vmatpush2.bf16.xpose.msra.mxu0 0
        %617 = vmatprep.subr.bf16.mxu0 0
        %618 = vmatpush2.bf16.xpose.msra.mxu0 0
        %619 = vmatprep.subr.bf16.mxu0 0
        %620 = vmatpush2.bf16.xpose.msra.mxu0 0
        %621 = vmatprep.subr.bf16.mxu0 0
        %622 = vmatpush2.bf16.xpose.msra.mxu0 0
        %623 = vmatprep.subr.bf16.mxu0 0
        %624 = vmatpush2.bf16.xpose.msra.mxu0 0
        %625 = vmatprep.subr.bf16.mxu0 0
        %626 = vmatpush2.bf16.xpose.msra.mxu0 0
        %627 = vmatprep.mubr.bf16.mxu0 0
        %628 = vmatmul.mubr.bf16.gmra.mxu0 %v590
        %v629 = vpop.f32.mrf.mxu0
        %v630 = vadd.f32 0.0, %v629
        %v631 = vpop.f32.mrf.mxu0
        %v632 = vpop.f32.mrf.mxu0
        %v633 = vpop.f32.mrf.mxu0
        %634 = vdwg.mxu0
        %v635 = vsel %vm588, %v630, -inf
        %636 = vmax.xlane.f32.xlu0 %v635
        %v637 = vpop.xlane.xlu0 %636
        %v638 = vsub.f32 %v630, %v637
        %v639 = vmul.f32 %v638, 1.442695
        %v640 = vpow.pop %v639
        %v641 = vsel %vm588, %v640, 0.0
        %642 = vadd.xlane.f32.xlu0 %v641
        %v643 = vpop.xlane.xlu0 %642
        %v644 = vrcp.pop %v643
        %v645 = vmul.f32 %v640, %v644
        %v646 = vpack.c.bf16 %v645, %v645
        %647 = vrot.lane.b32.xlu0 %v584, 64
        %v648 = vpop.permute.xlu0 %647
        %v650 = vsel %vm588, %v646, 0
        %vm652 = vcmask 1043456
        %v654 = vsel %vm652, %v648, 0
        %656 = vmatprep.subr.bf16.mxu0 0
        %657 = vmatpush1.bf16.msra.mxu0 0
        %658 = vmatprep.subr.bf16.mxu0 0
        %659 = vmatpush1.bf16.msra.mxu0 0
        %660 = vmatprep.subr.bf16.mxu0 0
        %661 = vmatpush1.bf16.msra.mxu0 0
        %662 = vmatprep.subr.bf16.mxu0 0
        %663 = vmatpush1.bf16.msra.mxu0 0
        %664 = vmatprep.subr.bf16.mxu0 0
        %665 = vmatpush1.bf16.msra.mxu0 0
        %666 = vmatprep.subr.bf16.mxu0 0
        %667 = vmatpush1.bf16.msra.mxu0 0
        %668 = vmatprep.subr.bf16.mxu0 0
        %669 = vmatpush1.bf16.msra.mxu0 0
        %670 = vmatprep.subr.bf16.mxu0 0
        %671 = vmatpush1.bf16.msra.mxu0 %v654
        %672 = vmatprep.subr.bf16.mxu0 0
        %673 = vmatpush2.bf16.msra.mxu0 0
        %674 = vmatprep.subr.bf16.mxu0 0
        %675 = vmatpush2.bf16.msra.mxu0 0
        %676 = vmatprep.subr.bf16.mxu0 0
        %677 = vmatpush2.bf16.msra.mxu0 0
        %678 = vmatprep.subr.bf16.mxu0 0
        %679 = vmatpush2.bf16.msra.mxu0 0
        %680 = vmatprep.subr.bf16.mxu0 0
        %681 = vmatpush2.bf16.msra.mxu0 0
        %682 = vmatprep.subr.bf16.mxu0 0
        %683 = vmatpush2.bf16.msra.mxu0 0
        %684 = vmatprep.subr.bf16.mxu0 0
        %685 = vmatpush2.bf16.msra.mxu0 0
        %686 = vmatprep.subr.bf16.mxu0 0
        %687 = vmatpush2.bf16.msra.mxu0 0
        %688 = vmatprep.mubr.bf16.mxu0 0
        %689 = vmatmul.mubr.bf16.gmra.mxu0 %v650
        %v690 = vpop.f32.mrf.mxu0
        %v691 = vadd.f32 0.0, %v690
        %v692 = vpop.f32.mrf.mxu0
        %v693 = vpop.f32.mrf.mxu0
        %v694 = vpop.f32.mrf.mxu0
        %695 = vdwg.mxu0
        %v696 = vpack.c.bf16 %v691, %v691
        %v697 = vld [vmem:[%s3] sm:$0xf]
        %698 = vrot.lane.b32.xlu0 %v584, 120
        %v699 = vpop.permute.xlu0 %698
        %700 = vrot.lane.b32.xlu0 %v584, 88
        %v701 = vpop.permute.xlu0 %700
        %v703 = vsel %vm588, %v699, 0
        %v706 = vsel %vm588, %v701, 0
        %708 = vmatprep.subr.bf16.mxu0 0
        %709 = vmatpush1.bf16.xpose.msra.mxu0 0
        %710 = vmatprep.subr.bf16.mxu0 0
        %711 = vmatpush1.bf16.xpose.msra.mxu0 0
        %712 = vmatprep.subr.bf16.mxu0 0
        %713 = vmatpush1.bf16.xpose.msra.mxu0 0
        %714 = vmatprep.subr.bf16.mxu0 0
        %715 = vmatpush1.bf16.xpose.msra.mxu0 0
        %716 = vmatprep.subr.bf16.mxu0 0
        %717 = vmatpush1.bf16.xpose.msra.mxu0 0
        %718 = vmatprep.subr.bf16.mxu0 0
        %719 = vmatpush1.bf16.xpose.msra.mxu0 0
        %720 = vmatprep.subr.bf16.mxu0 0
        %721 = vmatpush1.bf16.xpose.msra.mxu0 0
        %722 = vmatprep.subr.bf16.mxu0 0
        %723 = vmatpush1.bf16.xpose.msra.mxu0 %v706
        %724 = vmatprep.subr.bf16.mxu0 0
        %725 = vmatpush2.bf16.xpose.msra.mxu0 0
        %726 = vmatprep.subr.bf16.mxu0 0
        %727 = vmatpush2.bf16.xpose.msra.mxu0 0
        %728 = vmatprep.subr.bf16.mxu0 0
        %729 = vmatpush2.bf16.xpose.msra.mxu0 0
        %730 = vmatprep.subr.bf16.mxu0 0
        %731 = vmatpush2.bf16.xpose.msra.mxu0 0
        %732 = vmatprep.subr.bf16.mxu0 0
        %733 = vmatpush2.bf16.xpose.msra.mxu0 0
        %734 = vmatprep.subr.bf16.mxu0 0
        %735 = vmatpush2.bf16.xpose.msra.mxu0 0
        %736 = vmatprep.subr.bf16.mxu0 0
        %737 = vmatpush2.bf16.xpose.msra.mxu0 0
        %738 = vmatprep.subr.bf16.mxu0 0
        %739 = vmatpush2.bf16.xpose.msra.mxu0 0
        %740 = vmatprep.mubr.bf16.mxu0 0
        %741 = vmatmul.mubr.bf16.gmra.mxu0 %v703
        %v742 = vpop.f32.mrf.mxu0
        %v743 = vadd.f32 0.0, %v742
        %v744 = vpop.f32.mrf.mxu0
        %v745 = vpop.f32.mrf.mxu0
        %v746 = vpop.f32.mrf.mxu0
        %747 = vdwg.mxu0
        %v748 = vsel %vm588, %v743, -inf
        %749 = vmax.xlane.f32.xlu0 %v748
        %v750 = vpop.xlane.xlu0 %749
        %v751 = vsub.f32 %v743, %v750
        %v752 = vmul.f32 %v751, 1.442695
        %v753 = vpow.pop %v752
        %v754 = vsel %vm588, %v753, 0.0
        %755 = vadd.xlane.f32.xlu0 %v754
        %v756 = vpop.xlane.xlu0 %755
        %v757 = vrcp.pop %v756
        %v758 = vmul.f32 %v753, %v757
        %v759 = vpack.c.bf16 %v758, %v758
        %760 = vrot.lane.b32.xlu0 %v584, 56
        %v761 = vpop.permute.xlu0 %760
        %v763 = vsel %vm588, %v759, 0
        %v766 = vsel %vm652, %v761, 0
        %768 = vmatprep.subr.bf16.mxu0 0
        %769 = vmatpush1.bf16.msra.mxu0 0
        %770 = vmatprep.subr.bf16.mxu0 0
        %771 = vmatpush1.bf16.msra.mxu0 0
        %772 = vmatprep.subr.bf16.mxu0 0
        %773 = vmatpush1.bf16.msra.mxu0 0
        %774 = vmatprep.subr.bf16.mxu0 0
        %775 = vmatpush1.bf16.msra.mxu0 0
        %776 = vmatprep.subr.bf16.mxu0 0
        %777 = vmatpush1.bf16.msra.mxu0 0
        %778 = vmatprep.subr.bf16.mxu0 0
        %779 = vmatpush1.bf16.msra.mxu0 0
        %780 = vmatprep.subr.bf16.mxu0 0
        %781 = vmatpush1.bf16.msra.mxu0 0
        %782 = vmatprep.subr.bf16.mxu0 0
        %783 = vmatpush1.bf16.msra.mxu0 %v766
        %784 = vmatprep.subr.bf16.mxu0 0
        %785 = vmatpush2.bf16.msra.mxu0 0
        %786 = vmatprep.subr.bf16.mxu0 0
        %787 = vmatpush2.bf16.msra.mxu0 0
        %788 = vmatprep.subr.bf16.mxu0 0
        %789 = vmatpush2.bf16.msra.mxu0 0
        %790 = vmatprep.subr.bf16.mxu0 0
        %791 = vmatpush2.bf16.msra.mxu0 0
        %792 = vmatprep.subr.bf16.mxu0 0
        %793 = vmatpush2.bf16.msra.mxu0 0
        %794 = vmatprep.subr.bf16.mxu0 0
        %795 = vmatpush2.bf16.msra.mxu0 0
        %796 = vmatprep.subr.bf16.mxu0 0
        %797 = vmatpush2.bf16.msra.mxu0 0
        %798 = vmatprep.subr.bf16.mxu0 0
        %799 = vmatpush2.bf16.msra.mxu0 0
        %800 = vmatprep.mubr.bf16.mxu0 0
        %801 = vmatmul.mubr.bf16.gmra.mxu0 %v763
        %v802 = vpop.f32.mrf.mxu0
        %v803 = vadd.f32 0.0, %v802
        %v804 = vpop.f32.mrf.mxu0
        %v805 = vpop.f32.mrf.mxu0
        %v806 = vpop.f32.mrf.mxu0
        %807 = vdwg.mxu0
        %v808 = vpack.c.bf16 %v803, %v803
        %s809 = scalar_lea.vmem %s3, 4
        %v810 = vld [vmem:[%s809] sm:$0xf]
        %v812 = vsel %vm588, %v808, 0
        %v815 = vsel %vm652, %v810, 0
        %817 = vmatprep.subr.bf16.mxu0 0
        %818 = vmatpush1.bf16.msra.mxu0 0
        %819 = vmatprep.subr.bf16.mxu0 0
        %820 = vmatpush1.bf16.msra.mxu0 0
        %821 = vmatprep.subr.bf16.mxu0 0
        %822 = vmatpush1.bf16.msra.mxu0 0
        %823 = vmatprep.subr.bf16.mxu0 0
        %824 = vmatpush1.bf16.msra.mxu0 0
        %825 = vmatprep.subr.bf16.mxu0 0
        %826 = vmatpush1.bf16.msra.mxu0 0
        %827 = vmatprep.subr.bf16.mxu0 0
        %828 = vmatpush1.bf16.msra.mxu0 0
        %829 = vmatprep.subr.bf16.mxu0 0
        %830 = vmatpush1.bf16.msra.mxu0 0
        %831 = vmatprep.subr.bf16.mxu0 0
        %832 = vmatpush1.bf16.msra.mxu0 %v815
        %833 = vmatprep.subr.bf16.mxu0 0
        %834 = vmatpush2.bf16.msra.mxu0 0
        %835 = vmatprep.subr.bf16.mxu0 0
        %836 = vmatpush2.bf16.msra.mxu0 0
        %837 = vmatprep.subr.bf16.mxu0 0
        %838 = vmatpush2.bf16.msra.mxu0 0
        %839 = vmatprep.subr.bf16.mxu0 0
        %840 = vmatpush2.bf16.msra.mxu0 0
        %841 = vmatprep.subr.bf16.mxu0 0
        %842 = vmatpush2.bf16.msra.mxu0 0
        %843 = vmatprep.subr.bf16.mxu0 0
        %844 = vmatpush2.bf16.msra.mxu0 0
        %845 = vmatprep.subr.bf16.mxu0 0
        %846 = vmatpush2.bf16.msra.mxu0 0
        %847 = vmatprep.subr.bf16.mxu0 0
        %848 = vmatpush2.bf16.msra.mxu0 0
        %849 = vmatprep.mubr.bf16.mxu0 0
        %850 = vmatmul.mubr.bf16.gmra.mxu0 %v812
        %v851 = vpop.f32.mrf.mxu0
        %v852 = vadd.f32 0.0, %v851
        %v853 = vpop.f32.mrf.mxu0
        %v854 = vpop.f32.mrf.mxu0
        %v855 = vpop.f32.mrf.mxu0
        %856 = vdwg.mxu0
        %v858 = vsel %vm588, %v696, 0
        %v861 = vsel %vm652, %v697, 0
        %863 = vmatprep.subr.bf16.mxu0 0
        %864 = vmatpush1.bf16.msra.mxu0 0
        %865 = vmatprep.subr.bf16.mxu0 0
        %866 = vmatpush1.bf16.msra.mxu0 0
        %867 = vmatprep.subr.bf16.mxu0 0
        %868 = vmatpush1.bf16.msra.mxu0 0
        %869 = vmatprep.subr.bf16.mxu0 0
        %870 = vmatpush1.bf16.msra.mxu0 0
        %871 = vmatprep.subr.bf16.mxu0 0
        %872 = vmatpush1.bf16.msra.mxu0 0
        %873 = vmatprep.subr.bf16.mxu0 0
        %874 = vmatpush1.bf16.msra.mxu0 0
        %875 = vmatprep.subr.bf16.mxu0 0
        %876 = vmatpush1.bf16.msra.mxu0 0
        %877 = vmatprep.subr.bf16.mxu0 0
        %878 = vmatpush1.bf16.msra.mxu0 %v861
        %879 = vmatprep.subr.bf16.mxu0 0
        %880 = vmatpush2.bf16.msra.mxu0 0
        %881 = vmatprep.subr.bf16.mxu0 0
        %882 = vmatpush2.bf16.msra.mxu0 0
        %883 = vmatprep.subr.bf16.mxu0 0
        %884 = vmatpush2.bf16.msra.mxu0 0
        %885 = vmatprep.subr.bf16.mxu0 0
        %886 = vmatpush2.bf16.msra.mxu0 0
        %887 = vmatprep.subr.bf16.mxu0 0
        %888 = vmatpush2.bf16.msra.mxu0 0
        %889 = vmatprep.subr.bf16.mxu0 0
        %890 = vmatpush2.bf16.msra.mxu0 0
        %891 = vmatprep.subr.bf16.mxu0 0
        %892 = vmatpush2.bf16.msra.mxu0 0
        %893 = vmatprep.subr.bf16.mxu0 0
        %894 = vmatpush2.bf16.msra.mxu0 0
        %895 = vmatprep.mubr.bf16.mxu0 0
        %896 = vmatmul.mubr.bf16.gmra.mxu0 %v858
        %v897 = vpop.f32.mrf.mxu0
        %v898 = vadd.f32 %v852, %v897
        %v899 = vpop.f32.mrf.mxu0
        %v900 = vpop.f32.mrf.mxu0
        %v901 = vpop.f32.mrf.mxu0
        %902 = vdwg.mxu0
        %903 = vrot.lane.b32.xlu0 %v584, 112
        %v904 = vpop.permute.xlu0 %903
        %905 = vrot.lane.b32.xlu0 %v584, 80
        %v906 = vpop.permute.xlu0 %905
        %v908 = vsel %vm588, %v904, 0
        %v911 = vsel %vm588, %v906, 0
        %913 = vmatprep.subr.bf16.mxu0 0
        %914 = vmatpush1.bf16.xpose.msra.mxu0 0
        %915 = vmatprep.subr.bf16.mxu0 0
        %916 = vmatpush1.bf16.xpose.msra.mxu0 0
        %917 = vmatprep.subr.bf16.mxu0 0
        %918 = vmatpush1.bf16.xpose.msra.mxu0 0
        %919 = vmatprep.subr.bf16.mxu0 0
        %920 = vmatpush1.bf16.xpose.msra.mxu0 0
        %921 = vmatprep.subr.bf16.mxu0 0
        %922 = vmatpush1.bf16.xpose.msra.mxu0 0
        %923 = vmatprep.subr.bf16.mxu0 0
        %924 = vmatpush1.bf16.xpose.msra.mxu0 0
        %925 = vmatprep.subr.bf16.mxu0 0
        %926 = vmatpush1.bf16.xpose.msra.mxu0 0
        %927 = vmatprep.subr.bf16.mxu0 0
        %928 = vmatpush1.bf16.xpose.msra.mxu0 %v911
        %929 = vmatprep.subr.bf16.mxu0 0
        %930 = vmatpush2.bf16.xpose.msra.mxu0 0
        %931 = vmatprep.subr.bf16.mxu0 0
        %932 = vmatpush2.bf16.xpose.msra.mxu0 0
        %933 = vmatprep.subr.bf16.mxu0 0
        %934 = vmatpush2.bf16.xpose.msra.mxu0 0
        %935 = vmatprep.subr.bf16.mxu0 0
        %936 = vmatpush2.bf16.xpose.msra.mxu0 0
        %937 = vmatprep.subr.bf16.mxu0 0
        %938 = vmatpush2.bf16.xpose.msra.mxu0 0
        %939 = vmatprep.subr.bf16.mxu0 0
        %940 = vmatpush2.bf16.xpose.msra.mxu0 0
        %941 = vmatprep.subr.bf16.mxu0 0
        %942 = vmatpush2.bf16.xpose.msra.mxu0 0
        %943 = vmatprep.subr.bf16.mxu0 0
        %944 = vmatpush2.bf16.xpose.msra.mxu0 0
        %945 = vmatprep.mubr.bf16.mxu0 0
        %946 = vmatmul.mubr.bf16.gmra.mxu0 %v908
        %v947 = vpop.f32.mrf.mxu0
        %v948 = vadd.f32 0.0, %v947
        %v949 = vpop.f32.mrf.mxu0
        %v950 = vpop.f32.mrf.mxu0
        %v951 = vpop.f32.mrf.mxu0
        %952 = vdwg.mxu0
        %v953 = vsel %vm588, %v948, -inf
        %954 = vmax.xlane.f32.xlu0 %v953
        %v955 = vpop.xlane.xlu0 %954
        %v956 = vsub.f32 %v948, %v955
        %v957 = vmul.f32 %v956, 1.442695
        %v958 = vpow.pop %v957
        %v959 = vsel %vm588, %v958, 0.0
        %960 = vadd.xlane.f32.xlu0 %v959
        %v961 = vpop.xlane.xlu0 %960
        %v962 = vrcp.pop %v961
        %v963 = vmul.f32 %v958, %v962
        %v964 = vpack.c.bf16 %v963, %v963
        %965 = vrot.lane.b32.xlu0 %v584, 48
        %v966 = vpop.permute.xlu0 %965
        %v968 = vsel %vm588, %v964, 0
        %v971 = vsel %vm652, %v966, 0
        %973 = vmatprep.subr.bf16.mxu0 0
        %974 = vmatpush1.bf16.msra.mxu0 0
        %975 = vmatprep.subr.bf16.mxu0 0
        %976 = vmatpush1.bf16.msra.mxu0 0
        %977 = vmatprep.subr.bf16.mxu0 0
        %978 = vmatpush1.bf16.msra.mxu0 0
        %979 = vmatprep.subr.bf16.mxu0 0
        %980 = vmatpush1.bf16.msra.mxu0 0
        %981 = vmatprep.subr.bf16.mxu0 0
        %982 = vmatpush1.bf16.msra.mxu0 0
        %983 = vmatprep.subr.bf16.mxu0 0
        %984 = vmatpush1.bf16.msra.mxu0 0
        %985 = vmatprep.subr.bf16.mxu0 0
        %986 = vmatpush1.bf16.msra.mxu0 0
        %987 = vmatprep.subr.bf16.mxu0 0
        %988 = vmatpush1.bf16.msra.mxu0 %v971
        %989 = vmatprep.subr.bf16.mxu0 0
        %990 = vmatpush2.bf16.msra.mxu0 0
        %991 = vmatprep.subr.bf16.mxu0 0
        %992 = vmatpush2.bf16.msra.mxu0 0
        %993 = vmatprep.subr.bf16.mxu0 0
        %994 = vmatpush2.bf16.msra.mxu0 0
        %995 = vmatprep.subr.bf16.mxu0 0
        %996 = vmatpush2.bf16.msra.mxu0 0
        %997 = vmatprep.subr.bf16.mxu0 0
        %998 = vmatpush2.bf16.msra.mxu0 0
        %999 = vmatprep.subr.bf16.mxu0 0
        %1000 = vmatpush2.bf16.msra.mxu0 0
        %1001 = vmatprep.subr.bf16.mxu0 0
        %1002 = vmatpush2.bf16.msra.mxu0 0
        %1003 = vmatprep.subr.bf16.mxu0 0
        %1004 = vmatpush2.bf16.msra.mxu0 0
        %1005 = vmatprep.mubr.bf16.mxu0 0
        %1006 = vmatmul.mubr.bf16.gmra.mxu0 %v968
        %v1007 = vpop.f32.mrf.mxu0
        %v1008 = vadd.f32 0.0, %v1007
        %v1009 = vpop.f32.mrf.mxu0
        %v1010 = vpop.f32.mrf.mxu0
        %v1011 = vpop.f32.mrf.mxu0
        %1012 = vdwg.mxu0
        %v1013 = vpack.c.bf16 %v1008, %v1008
        %s1014 = scalar_lea.vmem %s3, 8
        %v1015 = vld [vmem:[%s1014] sm:$0xf]
        %v1017 = vsel %vm588, %v1013, 0
        %v1020 = vsel %vm652, %v1015, 0
        %1022 = vmatprep.subr.bf16.mxu0 0
        %1023 = vmatpush1.bf16.msra.mxu0 0
        %1024 = vmatprep.subr.bf16.mxu0 0
        %1025 = vmatpush1.bf16.msra.mxu0 0
        %1026 = vmatprep.subr.bf16.mxu0 0
        %1027 = vmatpush1.bf16.msra.mxu0 0
        %1028 = vmatprep.subr.bf16.mxu0 0
        %1029 = vmatpush1.bf16.msra.mxu0 0
        %1030 = vmatprep.subr.bf16.mxu0 0
        %1031 = vmatpush1.bf16.msra.mxu0 0
        %1032 = vmatprep.subr.bf16.mxu0 0
        %1033 = vmatpush1.bf16.msra.mxu0 0
        %1034 = vmatprep.subr.bf16.mxu0 0
        %1035 = vmatpush1.bf16.msra.mxu0 0
        %1036 = vmatprep.subr.bf16.mxu0 0
        %1037 = vmatpush1.bf16.msra.mxu0 %v1020
        %1038 = vmatprep.subr.bf16.mxu0 0
        %1039 = vmatpush2.bf16.msra.mxu0 0
        %1040 = vmatprep.subr.bf16.mxu0 0
        %1041 = vmatpush2.bf16.msra.mxu0 0
        %1042 = vmatprep.subr.bf16.mxu0 0
        %1043 = vmatpush2.bf16.msra.mxu0 0
        %1044 = vmatprep.subr.bf16.mxu0 0
        %1045 = vmatpush2.bf16.msra.mxu0 0
        %1046 = vmatprep.subr.bf16.mxu0 0
        %1047 = vmatpush2.bf16.msra.mxu0 0
        %1048 = vmatprep.subr.bf16.mxu0 0
        %1049 = vmatpush2.bf16.msra.mxu0 0
        %1050 = vmatprep.subr.bf16.mxu0 0
        %1051 = vmatpush2.bf16.msra.mxu0 0
        %1052 = vmatprep.subr.bf16.mxu0 0
        %1053 = vmatpush2.bf16.msra.mxu0 0
        %1054 = vmatprep.mubr.bf16.mxu0 0
        %1055 = vmatmul.mubr.bf16.gmra.mxu0 %v1017
        %v1056 = vpop.f32.mrf.mxu0
        %v1057 = vadd.f32 0.0, %v1056
        %v1058 = vpop.f32.mrf.mxu0
        %v1059 = vpop.f32.mrf.mxu0
        %v1060 = vpop.f32.mrf.mxu0
        %1061 = vdwg.mxu0
        %v1062 = vadd.f32 %v898, %v1057
        %1063 = vrot.lane.b32.xlu0 %v584, 104
        %v1064 = vpop.permute.xlu0 %1063
        %1065 = vrot.lane.b32.xlu0 %v584, 72
        %v1066 = vpop.permute.xlu0 %1065
        %v1068 = vsel %vm588, %v1064, 0
        %v1071 = vsel %vm588, %v1066, 0
        %1073 = vmatprep.subr.bf16.mxu0 0
        %1074 = vmatpush1.bf16.xpose.msra.mxu0 0
        %1075 = vmatprep.subr.bf16.mxu0 0
        %1076 = vmatpush1.bf16.xpose.msra.mxu0 0
        %1077 = vmatprep.subr.bf16.mxu0 0
        %1078 = vmatpush1.bf16.xpose.msra.mxu0 0
        %1079 = vmatprep.subr.bf16.mxu0 0
        %1080 = vmatpush1.bf16.xpose.msra.mxu0 0
        %1081 = vmatprep.subr.bf16.mxu0 0
        %1082 = vmatpush1.bf16.xpose.msra.mxu0 0
        %1083 = vmatprep.subr.bf16.mxu0 0
        %1084 = vmatpush1.bf16.xpose.msra.mxu0 0
        %1085 = vmatprep.subr.bf16.mxu0 0
        %1086 = vmatpush1.bf16.xpose.msra.mxu0 0
        %1087 = vmatprep.subr.bf16.mxu0 0
        %1088 = vmatpush1.bf16.xpose.msra.mxu0 %v1071
        %1089 = vmatprep.subr.bf16.mxu0 0
        %1090 = vmatpush2.bf16.xpose.msra.mxu0 0
        %1091 = vmatprep.subr.bf16.mxu0 0
        %1092 = vmatpush2.bf16.xpose.msra.mxu0 0
        %1093 = vmatprep.subr.bf16.mxu0 0
        %1094 = vmatpush2.bf16.xpose.msra.mxu0 0
        %1095 = vmatprep.subr.bf16.mxu0 0
        %1096 = vmatpush2.bf16.xpose.msra.mxu0 0
        %1097 = vmatprep.subr.bf16.mxu0 0
        %1098 = vmatpush2.bf16.xpose.msra.mxu0 0
        %1099 = vmatprep.subr.bf16.mxu0 0
        %1100 = vmatpush2.bf16.xpose.msra.mxu0 0
        %1101 = vmatprep.subr.bf16.mxu0 0
        %1102 = vmatpush2.bf16.xpose.msra.mxu0 0
        %1103 = vmatprep.subr.bf16.mxu0 0
        %1104 = vmatpush2.bf16.xpose.msra.mxu0 0
        %1105 = vmatprep.mubr.bf16.mxu0 0
        %1106 = vmatmul.mubr.bf16.gmra.mxu0 %v1068
        %v1107 = vpop.f32.mrf.mxu0
        %v1108 = vadd.f32 0.0, %v1107
        %v1109 = vpop.f32.mrf.mxu0
        %v1110 = vpop.f32.mrf.mxu0
        %v1111 = vpop.f32.mrf.mxu0
        %1112 = vdwg.mxu0
        %v1113 = vsel %vm588, %v1108, -inf
        %1114 = vmax.xlane.f32.xlu0 %v1113
        %v1115 = vpop.xlane.xlu0 %1114
        %v1116 = vsub.f32 %v1108, %v1115
        %v1117 = vmul.f32 %v1116, 1.442695
        %v1118 = vpow.pop %v1117
        %v1119 = vsel %vm588, %v1118, 0.0
        %1120 = vadd.xlane.f32.xlu0 %v1119
        %v1121 = vpop.xlane.xlu0 %1120
        %v1122 = vrcp.pop %v1121
        %v1123 = vmul.f32 %v1118, %v1122
        %v1124 = vpack.c.bf16 %v1123, %v1123
        %1125 = vrot.lane.b32.xlu0 %v584, 40
        %v1126 = vpop.permute.xlu0 %1125
        %v1128 = vsel %vm588, %v1124, 0
        %v1131 = vsel %vm652, %v1126, 0
        %1133 = vmatprep.subr.bf16.mxu0 0
        %1134 = vmatpush1.bf16.msra.mxu0 0
        %1135 = vmatprep.subr.bf16.mxu0 0
        %1136 = vmatpush1.bf16.msra.mxu0 0
        %1137 = vmatprep.subr.bf16.mxu0 0
        %1138 = vmatpush1.bf16.msra.mxu0 0
        %1139 = vmatprep.subr.bf16.mxu0 0
        %1140 = vmatpush1.bf16.msra.mxu0 0
        %1141 = vmatprep.subr.bf16.mxu0 0
        %1142 = vmatpush1.bf16.msra.mxu0 0
        %1143 = vmatprep.subr.bf16.mxu0 0
        %1144 = vmatpush1.bf16.msra.mxu0 0
        %1145 = vmatprep.subr.bf16.mxu0 0
        %1146 = vmatpush1.bf16.msra.mxu0 0
        %1147 = vmatprep.subr.bf16.mxu0 0
        %1148 = vmatpush1.bf16.msra.mxu0 %v1131
        %1149 = vmatprep.subr.bf16.mxu0 0
        %1150 = vmatpush2.bf16.msra.mxu0 0
        %1151 = vmatprep.subr.bf16.mxu0 0
        %1152 = vmatpush2.bf16.msra.mxu0 0
        %1153 = vmatprep.subr.bf16.mxu0 0
        %1154 = vmatpush2.bf16.msra.mxu0 0
        %1155 = vmatprep.subr.bf16.mxu0 0
        %1156 = vmatpush2.bf16.msra.mxu0 0
        %1157 = vmatprep.subr.bf16.mxu0 0
        %1158 = vmatpush2.bf16.msra.mxu0 0
        %1159 = vmatprep.subr.bf16.mxu0 0
        %1160 = vmatpush2.bf16.msra.mxu0 0
        %1161 = vmatprep.subr.bf16.mxu0 0
        %1162 = vmatpush2.bf16.msra.mxu0 0
        %1163 = vmatprep.subr.bf16.mxu0 0
        %1164 = vmatpush2.bf16.msra.mxu0 0
        %1165 = vmatprep.mubr.bf16.mxu0 0
        %1166 = vmatmul.mubr.bf16.gmra.mxu0 %v1128
        %v1167 = vpop.f32.mrf.mxu0
        %v1168 = vadd.f32 0.0, %v1167
        %v1169 = vpop.f32.mrf.mxu0
        %v1170 = vpop.f32.mrf.mxu0
        %v1171 = vpop.f32.mrf.mxu0
        %1172 = vdwg.mxu0
        %v1173 = vpack.c.bf16 %v1168, %v1168
        %s1174 = scalar_lea.vmem %s3, 12
        %v1175 = vld [vmem:[%s1174] sm:$0xf]
        %v1177 = vsel %vm588, %v1173, 0
        %v1180 = vsel %vm652, %v1175, 0
        %1182 = vmatprep.subr.bf16.mxu0 0
        %1183 = vmatpush1.bf16.msra.mxu0 0
        %1184 = vmatprep.subr.bf16.mxu0 0
        %1185 = vmatpush1.bf16.msra.mxu0 0
        %1186 = vmatprep.subr.bf16.mxu0 0
        %1187 = vmatpush1.bf16.msra.mxu0 0
        %1188 = vmatprep.subr.bf16.mxu0 0
        %1189 = vmatpush1.bf16.msra.mxu0 0
        %1190 = vmatprep.subr.bf16.mxu0 0
        %1191 = vmatpush1.bf16.msra.mxu0 0
        %1192 = vmatprep.subr.bf16.mxu0 0
        %1193 = vmatpush1.bf16.msra.mxu0 0
        %1194 = vmatprep.subr.bf16.mxu0 0
        %1195 = vmatpush1.bf16.msra.mxu0 0
        %1196 = vmatprep.subr.bf16.mxu0 0
        %1197 = vmatpush1.bf16.msra.mxu0 %v1180
        %1198 = vmatprep.subr.bf16.mxu0 0
        %1199 = vmatpush2.bf16.msra.mxu0 0
        %1200 = vmatprep.subr.bf16.mxu0 0
        %1201 = vmatpush2.bf16.msra.mxu0 0
        %1202 = vmatprep.subr.bf16.mxu0 0
        %1203 = vmatpush2.bf16.msra.mxu0 0
        %1204 = vmatprep.subr.bf16.mxu0 0
        %1205 = vmatpush2.bf16.msra.mxu0 0
        %1206 = vmatprep.subr.bf16.mxu0 0
        %1207 = vmatpush2.bf16.msra.mxu0 0
        %1208 = vmatprep.subr.bf16.mxu0 0
        %1209 = vmatpush2.bf16.msra.mxu0 0
        %1210 = vmatprep.subr.bf16.mxu0 0
        %1211 = vmatpush2.bf16.msra.mxu0 0
        %1212 = vmatprep.subr.bf16.mxu0 0
        %1213 = vmatpush2.bf16.msra.mxu0 0
        %1214 = vmatprep.mubr.bf16.mxu0 0
        %1215 = vmatmul.mubr.bf16.gmra.mxu0 %v1177
        %v1216 = vpop.f32.mrf.mxu0
        %v1217 = vadd.f32 0.0, %v1216
        %v1218 = vpop.f32.mrf.mxu0
        %v1219 = vpop.f32.mrf.mxu0
        %v1220 = vpop.f32.mrf.mxu0
        %1221 = vdwg.mxu0
        %v1222 = vadd.f32 %v1062, %v1217
        %v1223 = vld [vmem:[#allocation5] sm:$0x1]
        %v1225 = vlaneseq
        %v1226 = vshrl.u32 %v1225, 7
        %v1227 = vsub.s32 0, %v1226
        %v1228 = vrot.slane %v1223, %v1227
        %v1230 = vadd.f32 %v1222, %v1228
        %v1231 = vadd.f32 %v515, %v1230
        %v1232 = vld [vmem:[#allocation7] sm:$0x1]
        %v1233 = vld [vmem:[#allocation8] sm:$0x1]
        %v1234 = vsel %vm540, %v1231, 0.0
        %1235 = vadd.xlane.f32.xlu0 %v1234
        %v1236 = vpop.xlane.xlu0 %1235
        %v1237 = vrcp.pop 32.0
        %v1238 = vmul.f32 %v1236, %v1237
        %v1239 = vsub.f32 %v1231, %v1238
        %v1240 = vmul.f32 %v1239, %v1239
        %v1241 = vsel %vm540, %v1240, 0.0
        %1242 = vadd.xlane.f32.xlu0 %v1241
        %v1243 = vpop.xlane.xlu0 %1242
        %v1244 = vmul.f32 %v1243, %v1237
        %v1245 = vadd.f32 %v1244, 1e-05
        %v1246 = vrsqrt.pop %v1245
        %v1247 = vmul.f32 %v1239, %v1246
        %v1249 = vlaneseq
        %v1250 = vshrl.u32 %v1249, 7
        %v1251 = vsub.s32 0, %v1250
        %v1252 = vrot.slane %v1232, %v1251
        %v1254 = vmul.f32 %v1247, %v1252
        %v1256 = vlaneseq
        %v1257 = vshrl.u32 %v1256, 7
        %v1258 = vsub.s32 0, %v1257
        %v1259 = vrot.slane %v1233, %v1258
        %v1261 = vadd.f32 %v1254, %v1259
        %v1262 = vpack.c.bf16 %v1261, %v1261
        %v1263 = vld [vmem:[#allocation10] sm:$0xf]
        %v1264 = vld [vmem:[#allocation10 + $0x4] sm:$0xf]
        %v1265 = vld [vmem:[#allocation10 + $0x8] sm:$0xf]
        %v1266 = vld [vmem:[#allocation10 + $0xc] sm:$0xf]
        %v1267 = vld [vmem:[#allocation11] sm:$0x1]
        %v1269 = vlaneseq
        %v1270 = vshrl.u32 %v1269, 7
        %v1271 = vsub.s32 0, %v1270
        %v1272 = vrot.slane %v1267, %v1271
        %v1278 = vunpack.c.l.b16 %v1263
        %v1279 = vunpack.c.l.b16 %v1264
        %v1280 = vunpack.c.l.b16 %v1265
        %v1281 = vunpack.c.l.b16 %v1266
        %v1282 = vpack.c.b16 %v1279, %v1278
        %v1283 = vpack.c.b16 %v1281, %v1280
        %v1287 = vsel %vm540, %v1262, 0
        %1289 = vmatprep.subr.bf16.mxu0 0
        %1290 = vmatpush1.bf16.msra.mxu0 0
        %1291 = vmatprep.subr.bf16.mxu0 0
        %1292 = vmatpush1.bf16.msra.mxu0 0
        %1293 = vmatprep.subr.bf16.mxu0 0
        %1294 = vmatpush1.bf16.msra.mxu0 0
        %1295 = vmatprep.subr.bf16.mxu0 0
        %1296 = vmatpush1.bf16.msra.mxu0 0
        %1297 = vmatprep.subr.bf16.mxu0 0
        %1298 = vmatpush1.bf16.msra.mxu0 0
        %1299 = vmatprep.subr.bf16.mxu0 0
        %1300 = vmatpush1.bf16.msra.mxu0 0
        %1301 = vmatprep.subr.bf16.mxu0 0
        %1302 = vmatpush1.bf16.msra.mxu0 %v1283
        %1303 = vmatprep.subr.bf16.mxu0 0
        %1304 = vmatpush1.bf16.msra.mxu0 %v1282
        %1305 = vmatprep.subr.bf16.mxu0 0
        %1306 = vmatpush2.bf16.msra.mxu0 0
        %1307 = vmatprep.subr.bf16.mxu0 0
        %1308 = vmatpush2.bf16.msra.mxu0 0
        %1309 = vmatprep.subr.bf16.mxu0 0
        %1310 = vmatpush2.bf16.msra.mxu0 0
        %1311 = vmatprep.subr.bf16.mxu0 0
        %1312 = vmatpush2.bf16.msra.mxu0 0
        %1313 = vmatprep.subr.bf16.mxu0 0
        %1314 = vmatpush2.bf16.msra.mxu0 0
        %1315 = vmatprep.subr.bf16.mxu0 0
        %1316 = vmatpush2.bf16.msra.mxu0 0
        %1317 = vmatprep.subr.bf16.mxu0 0
        %1318 = vmatpush2.bf16.msra.mxu0 0
        %1319 = vmatprep.subr.bf16.mxu0 0
        %1320 = vmatpush2.bf16.msra.mxu0 0
        %1321 = vmatprep.mubr.bf16.mxu0 0
        %1322 = vmatmul.mubr.bf16.gmra.mxu0 %v1287
        %v1323 = vpop.f32.mrf.mxu0
        %v1324 = vadd.f32 %v1272, %v1323
        %v1325 = vpop.f32.mrf.mxu0
        %v1326 = vpop.f32.mrf.mxu0
        %v1327 = vpop.f32.mrf.mxu0
        %1328 = vdwg.mxu0
        %v1329 = vmax.f32 %v1324, 0.0
        %v1330 = vpack.c.bf16 %v1329, %v1329
        %v1331 = vld [vmem:[%s9] sm:$0xf]
        %v1332 = vld [vmem:[%s9 + $0x4] sm:$0xf]
        %v1333 = vld [vmem:[%s9 + $0x8] sm:$0xf]
        %v1334 = vld [vmem:[%s9 + $0xc] sm:$0xf]
        %v1335 = vld [vmem:[%s9 + $0x10] sm:$0xf]
        %v1336 = vld [vmem:[%s9 + $0x14] sm:$0xf]
        %v1337 = vld [vmem:[%s9 + $0x18] sm:$0xf]
        %v1338 = vld [vmem:[%s9 + $0x1c] sm:$0xf]
        %v1339 = vld [vmem:[%s10] sm:$0x1]
        %v1341 = vlaneseq
        %v1342 = vshrl.u32 %v1341, 7
        %v1343 = vsub.s32 0, %v1342
        %v1344 = vrot.slane %v1339, %v1343
        %v1354 = vunpack.c.l.b16 %v1331
        %v1355 = vunpack.c.l.b16 %v1332
        %v1356 = vunpack.c.l.b16 %v1333
        %v1357 = vunpack.c.l.b16 %v1334
        %v1358 = vunpack.c.l.b16 %v1335
        %v1359 = vunpack.c.l.b16 %v1336
        %v1360 = vunpack.c.l.b16 %v1337
        %v1361 = vunpack.c.l.b16 %v1338
        %v1362 = vpack.c.b16 %v1355, %v1354
        %v1363 = vpack.c.b16 %v1357, %v1356
        %v1364 = vpack.c.b16 %v1359, %v1358
        %v1365 = vpack.c.b16 %v1361, %v1360
        %vm1370 = vcmask 523264
        %v1372 = vsel %vm1370, %v1330, 0
        %1374 = vmatprep.subr.bf16.mxu0 0
        %1375 = vmatpush1.bf16.msra.mxu0 0
        %1376 = vmatprep.subr.bf16.mxu0 0
        %1377 = vmatpush1.bf16.msra.mxu0 0
        %1378 = vmatprep.subr.bf16.mxu0 0
        %1379 = vmatpush1.bf16.msra.mxu0 0
        %1380 = vmatprep.subr.bf16.mxu0 0
        %1381 = vmatpush1.bf16.msra.mxu0 0
        %1382 = vmatprep.subr.bf16.mxu0 0
        %1383 = vmatpush1.bf16.msra.mxu0 %v1365
        %1384 = vmatprep.subr.bf16.mxu0 0
        %1385 = vmatpush1.bf16.msra.mxu0 %v1364
        %1386 = vmatprep.subr.bf16.mxu0 0
        %1387 = vmatpush1.bf16.msra.mxu0 %v1363
        %1388 = vmatprep.subr.bf16.mxu0 0
        %1389 = vmatpush1.bf16.msra.mxu0 %v1362
        %1390 = vmatprep.subr.bf16.mxu0 0
        %1391 = vmatpush2.bf16.msra.mxu0 0
        %1392 = vmatprep.subr.bf16.mxu0 0
        %1393 = vmatpush2.bf16.msra.mxu0 0
        %1394 = vmatprep.subr.bf16.mxu0 0
        %1395 = vmatpush2.bf16.msra.mxu0 0
        %1396 = vmatprep.subr.bf16.mxu0 0
        %1397 = vmatpush2.bf16.msra.mxu0 0
        %1398 = vmatprep.subr.bf16.mxu0 0
        %1399 = vmatpush2.bf16.msra.mxu0 0
        %1400 = vmatprep.subr.bf16.mxu0 0
        %1401 = vmatpush2.bf16.msra.mxu0 0
        %1402 = vmatprep.subr.bf16.mxu0 0
        %1403 = vmatpush2.bf16.msra.mxu0 0
        %1404 = vmatprep.subr.bf16.mxu0 0
        %1405 = vmatpush2.bf16.msra.mxu0 0
        %1406 = vmatprep.mubr.bf16.mxu0 0
        %1407 = vmatmul.mubr.bf16.gmra.mxu0 %v1372
        %v1408 = vpop.f32.mrf.mxu0
        %v1409 = vadd.f32 %v1344, %v1408
        %v1410 = vpop.f32.mrf.mxu0
        %v1411 = vpop.f32.mrf.mxu0
        %v1412 = vpop.f32.mrf.mxu0
        %1413 = vdwg.mxu0
        %v1414 = vadd.f32 %v1261, %v1409
        %v1415 = vld [vmem:[%s11] sm:$0x1]
        %v1416 = vld [vmem:[%s12] sm:$0x1]
        %v1417 = vsel %vm540, %v1414, 0.0
        %1418 = vadd.xlane.f32.xlu0 %v1417
        %v1419 = vpop.xlane.xlu0 %1418
        %v1420 = vmul.f32 %v1419, %v1237
        %v1421 = vsub.f32 %v1414, %v1420
        %v1422 = vmul.f32 %v1421, %v1421
        %v1423 = vsel %vm540, %v1422, 0.0
        %1424 = vadd.xlane.f32.xlu0 %v1423
        %v1425 = vpop.xlane.xlu0 %1424
        %v1426 = vmul.f32 %v1425, %v1237
        %v1427 = vadd.f32 %v1426, 1e-05
        %v1428 = vrsqrt.pop %v1427
        %v1429 = vmul.f32 %v1421, %v1428
        %v1431 = vlaneseq
        %v1432 = vshrl.u32 %v1431, 7
        %v1433 = vsub.s32 0, %v1432
        %v1434 = vrot.slane %v1415, %v1433
        %v1436 = vmul.f32 %v1429, %v1434
        %v1438 = vlaneseq
        %v1439 = vshrl.u32 %v1438, 7
        %v1440 = vsub.s32 0, %v1439
        %v1441 = vrot.slane %v1416, %v1440
        %v1443 = vadd.f32 %v1436, %v1441
        %1444 = vst.msk [vmem:[%s509] sm:$0xff] %vm540, %v1443
        %s1445 = sand.u32 %s317, 1
        %s1446 = scalar_lea.sflag [#allocation4], %s1445
        %s1447 = sand.u32 %s317, 1
        %s1448 = smul.addr %s1447, 8
        %s1449 = scalar_lea.vmem [#allocation13], %s1448
        // Predicated region
        $region97: #{tpu_custom_call.1} parent=71 // pred_check
          %p1450 = pneg %p327
        $region98: #{tpu_custom_call.1} parent=71 // pred_check_branch
          %1452 = sbr.rel (%p1450) target = $region100
        $region99: #{tpu_custom_call.1} parent=71 // pred_region
          %s1454 = ssub.s32 128, 128
          %1455 = vsyncadd %s1446, %s1454
          %s1456 = smul.addr %s31, 128
          %s1457 = scalar_lea.hbm %s13, %s1456
          %s1459 = sshll.u32 %s1449, 4
          %s1460 = int_to_ptr.vmem [resolvable:$true] %s1459
          %1462 = dma.vmem_to_hbm [thread:$0]  %s1460, 128, %s1457, %s1446
        $region100: #{tpu_custom_call.1} parent=71 // pred_fallthru
          _
      $region72: #{tpu_custom_call.1} parent=5 // pred_fallthru
        _
      %p1463 = scmp.le.s32.totalorder 2, %s26
      // Predicated region
      $region101: #{tpu_custom_call.1} parent=5 // pred_check
        %p1464 = pneg %p1463
      $region102: #{tpu_custom_call.1} parent=5 // pred_check_branch
        %1466 = sbr.rel (%p1464) target = $region104
      $region103: #{tpu_custom_call.1} parent=5 // pred_region
        %s1467 = ssub.s32 %s26, 2
        // Predicated region
        $region105: #{tpu_custom_call.1} parent=103 // pred_check
          %p1468 = pneg %p333
        $region106: #{tpu_custom_call.1} parent=103 // pred_check_branch
          %1470 = sbr.rel (%p1468) target = $region108
        $region107: #{tpu_custom_call.1} parent=103 // pred_region
          %s1471 = sand.u32 %s318, 1
          %s1472 = scalar_lea.sflag [#allocation4], %s1471
          %s1473 = sand.u32 %s318, 1
          %s1474 = smul.addr %s1473, 8
          %s1475 = scalar_lea.vmem [#allocation13], %s1474
          %1476 = dma.done %s1472, 128
        $region108: #{tpu_custom_call.1} parent=103 // pred_fallthru
          _
      $region104: #{tpu_custom_call.1} parent=5 // pred_fallthru
        _
    $region6: #{tpu_custom_call.1} parent=1 // loop_footer
      %s30 = sadd.s32 1, %s26
    $region7: #{tpu_custom_call.1} parent=1 // loop_footer_branch
      %25 = sbr.rel target = $region3
    $region8: #{tpu_custom_call.1} parent=1 // loop_exit
      _
    %1477 = vsyncpa [#allocation3], 1
    %s1478 = scalar_lea.sflag [#allocation3], 1
    %1479 = vsyncpa %s1478, 1
    %1480 = vsyncpa [#allocation6], 1
    %1481 = vsyncpa [#allocation9], 1
    %1482 = vsyncpa [#allocation12], 1
    %1483 = vsyncpa [#allocation4], 1
    %s1484 = scalar_lea.sflag [#allocation4], 1
    %1485 = vsyncpa %s1484, 1

</llo_original>
